<compile_context>
chip_gen: v6e
topology: v6e:2x2x1
jax: 0.10.0
libtpu: 0.0.40
codegen_flags: <defaults>
</compile_context>

<pallas_src>
import functools

import jax
import jax.numpy as jnp
from jax.experimental import pallas as pl
from jax.experimental.pallas import tpu as pltpu

_MIB = 1024 * 1024


# ---------------------------------------------------------------------------
# Fused kernel: hoisted x-projection + serial LSTM recurrence
# ---------------------------------------------------------------------------
def _lstm_fused_kernel(x_ref, wih_ref, whh_ref, b_ref, h_out_ref,
                       pg_sc, h_sc, c_sc, *, unroll):
    """One grid step = one (TS, TB) tile.

    x_ref   : (TS, TB, F)  embedded inputs (mxu dtype)
    wih_ref : (F, 4F)      W_ih^T   (grid-invariant, VMEM resident)
    whh_ref : (F, 4F)      W_hh^T   (grid-invariant, VMEM resident)
    b_ref   : (1, 4F)      b_ih + b_hh (f32)
    h_out   : (TB, F)      final hidden state (written on the last time tile)
    pg_sc   : (TS, TB, 4F) f32 pre-gate scratch
    h_sc/c_sc: (TB, F)     f32 carries across time tiles
    (F here is the lane-padded feature size, a multiple of 128.)
    """
    t_idx = pl.program_id(1)

    @pl.when(t_idx == 0)
    def _():
        h_sc[...] = jnp.zeros_like(h_sc)
        c_sc[...] = jnp.zeros_like(c_sc)

    ts, tb, feat = x_ref.shape

    # Hoisted time-parallel input projection: ONE tall MXU matmul per tile
    # instead of TS small matmuls on the serial chain.  TB is a multiple of 8
    # and F a multiple of 128, so both reshapes are tile-aligned no-ops.
    x2d = x_ref[...].reshape(ts * tb, feat)
    pg2d = jnp.dot(x2d, wih_ref[...],
                   preferred_element_type=jnp.float32) + b_ref[...]
    pg_sc[...] = pg2d.reshape(ts, tb, 4 * feat)

    def step(s_i, carry):
        h, c = carry
        # Only the h-projection remains inside the serial dependency chain.
        # whh_ref is already VMEM-resident (constant index map); stream it per
        # step rather than carrying a live (F,4F) value across the loop.
        gates = pg_sc[s_i] + jnp.dot(
            h.astype(whh_ref.dtype), whh_ref[...],
            preferred_element_type=jnp.float32)
        # PyTorch gate order [i, f, g, o]; slices are whole 128-lane tiles.
        i_g = jax.nn.sigmoid(gates[:, 0 * feat:1 * feat])
        f_g = jax.nn.sigmoid(gates[:, 1 * feat:2 * feat])
        g_g = jnp.tanh(gates[:, 2 * feat:3 * feat])
        o_g = jax.nn.sigmoid(gates[:, 3 * feat:4 * feat])
        c = f_g * c + i_g * g_g            # gate math / carries stay f32
        h = o_g * jnp.tanh(c)
        return h, c

    # TODO(synk): for very small TB*F, interleave two independent batch
    # sub-tiles here (two (h,c) carries, back-to-back matmuls) to hide
    # MXU/EUP latency on the serial chain.
    h_new, c_new = jax.lax.fori_loop(0, ts, step, (h_sc[...], c_sc[...]),
                                     unroll=unroll)
    h_sc[...] = h_new
    c_sc[...] = c_new

    @pl.when(t_idx == pl.num_programs(1) - 1)
    def _():
        h_out_ref[...] = h_new.astype(h_out_ref.dtype)


# ---------------------------------------------------------------------------
# Padding / tiling helpers
# ---------------------------------------------------------------------------
def _round_up(n, m):
    return ((n + m - 1) // m) * m


def _pad_weight_t(w, f, f_pad):
    """PyTorch (4F, F) gate-stacked weight -> (F_pad, 4*F_pad) transpose with
    per-gate zero padding (column blocks [i|f|g|o], each F_pad wide)."""
    w4 = w.reshape(4, f, f)                              # (gate, out, in)
    if f_pad != f:
        w4 = jnp.pad(w4, ((0, 0), (0, f_pad - f), (0, f_pad - f)))
    return jnp.transpose(w4, (2, 0, 1)).reshape(f_pad, 4 * f_pad)


def _pad_bias(bias, f, f_pad):
    b4 = bias.reshape(4, f)
    if f_pad != f:
        b4 = jnp.pad(b4, ((0, 0), (0, f_pad - f)))
    return b4.reshape(1, 4 * f_pad).astype(jnp.float32)


def _vmem_config():
    """(vmem_limit_bytes, tile_budget_bytes, prefer_split_batch)."""
    try:
        cap = int(pltpu.get_tpu_info().vmem_capacity_bytes)
    except Exception:
        cap = 64 * _MIB                        # conservative fallback
    vmem_limit = int(cap * 0.85)               # ~108 MiB v5e/v6e, ~54 MiB v7x
    tile_budget = int(vmem_limit * 0.85)       # headroom for Mosaic internals
    # 64-MiB-per-core parts (v7x-like) have 2 TensorCores: keep >=2 batch
    # tiles so the "parallel" axis actually shards across both cores.
    prefer_split_batch = cap <= 64 * _MIB
    return vmem_limit, tile_budget, prefer_split_batch


def _tile_cost_bytes(ts, tb, f_pad, x_isz, w_isz):
    """Per-grid-step VMEM use of the fused kernel (double buffers included)."""
    weights = 2 * 2 * (f_pad * 4 * f_pad) * w_isz   # W_ih^T + W_hh^T, dbl-buf
    bias = 2 * 8 * (4 * f_pad) * 4                  # (1,4F) f32, sublane-padded
    x_blk = 2 * ts * tb * f_pad * x_isz             # input tile, dbl-buf
    out_blk = 2 * tb * f_pad * 4                    # h_out tile (f32), dbl-buf
    pg_scr = ts * tb * 4 * f_pad * 4                # pre-gate scratch (f32)
    hc_scr = 2 * tb * f_pad * 4                     # h/c carries (f32)
    return weights + bias + x_blk + out_blk + pg_scr + hc_scr


def _pick_tiles(s, b_pad, f_pad, x_isz, w_isz, budget, prefer_split_batch):
    """Largest (ts, tb) that fits the VMEM budget.  ts | s, tb | b_pad, 8 | tb."""
    tb_cands = [d for d in range(b_pad, 7, -1) if b_pad % d == 0 and d % 8 == 0]
    if prefer_split_batch and b_pad >= 16:
        split = [d for d in tb_cands if d <= b_pad // 2]
        tb_cands = split + [d for d in tb_cands if d > b_pad // 2]
    ts_cands = [d for d in range(min(s, 128), 0, -1) if s % d == 0]
    for tb in tb_cands:
        for ts in ts_cands:
            if _tile_cost_bytes(ts, tb, f_pad, x_isz, w_isz) <= budget:
                return ts, tb
    # Weights alone exceed the budget (huge F).
    # TODO(synk): N-tile the 4F axis of the weights for that regime.
    return 1, 8


# ---------------------------------------------------------------------------
# Wrappers
# ---------------------------------------------------------------------------
def lstm_final_hidden(embedded, w_ih, w_hh, b_ih, b_hh, *,
                      mxu_dtype=jnp.bfloat16):
    """embedded: (S, B, F) f32.  PyTorch-layout weights: w_ih, w_hh: (4F, F);
    b_ih, b_hh: (4F,).  Returns final hidden state (B, F) float32.

    mxu_dtype=jnp.bfloat16 (default) runs both matmuls on the bf16-native MXU
    path; accumulation / gate math / h,c carries stay float32.  Pass
    jnp.float32 for bit-accuracy-sensitive workloads."""
    s, b, f = embedded.shape
    f_pad = _round_up(f, 128)        # whole 128-lane tiles per gate slice
    b_pad = _round_up(b, 8)          # whole sublane tiles per batch tile

    x = embedded
    if (f_pad != f) or (b_pad != b):
        x = jnp.pad(x, ((0, 0), (0, b_pad - b), (0, f_pad - f)))
    x = x.astype(mxu_dtype)

    wih_t = _pad_weight_t(w_ih, f, f_pad).astype(mxu_dtype)    # (F_pad, 4F_pad)
    whh_t = _pad_weight_t(w_hh, f, f_pad).astype(mxu_dtype)    # (F_pad, 4F_pad)
    bias = _pad_bias(b_ih + b_hh, f, f_pad)                    # (1, 4F_pad) f32

    vmem_limit, budget, prefer_split = _vmem_config()
    isz = jnp.dtype(mxu_dtype).itemsize
    ts, tb = _pick_tiles(s, b_pad, f_pad, isz, isz, budget, prefer_split)
    grid = (b_pad // tb, s // ts)
    unroll = True if ts <= 32 else 8          # full / partial unroll of time loop

    kernel = functools.partial(_lstm_fused_kernel, unroll=unroll)
    h = pl.pallas_call(
        kernel,
        out_shape=jax.ShapeDtypeStruct((b_pad, f_pad), jnp.float32),
        grid_spec=pltpu.PrefetchScalarGridSpec(
            num_scalar_prefetch=0,
            grid=grid,
            in_specs=[
                # embedded time/batch tile
                pl.BlockSpec((ts, tb, f_pad), lambda bi, ti: (ti, bi, 0)),
                # W_ih^T / W_hh^T / bias: constant index maps -> fetched once,
                # stay VMEM resident across the whole grid.
                pl.BlockSpec((f_pad, 4 * f_pad), lambda bi, ti: (0, 0)),
                pl.BlockSpec((f_pad, 4 * f_pad), lambda bi, ti: (0, 0)),
                pl.BlockSpec((1, 4 * f_pad), lambda bi, ti: (0, 0)),
            ],
            out_specs=pl.BlockSpec((tb, f_pad), lambda bi, ti: (bi, 0)),
            scratch_shapes=[
                pltpu.VMEM((ts, tb, 4 * f_pad), jnp.float32),   # pre-gates
                pltpu.VMEM((tb, f_pad), jnp.float32),           # h carry
                pltpu.VMEM((tb, f_pad), jnp.float32),           # c carry
            ],
        ),
        compiler_params=pltpu.CompilerParams(
            # batch tiles feed both v7x TensorCores; time axis is sequential.
            dimension_semantics=("parallel", "arbitrary"),
            vmem_limit_bytes=vmem_limit),
    )(x, wih_t, whh_t, bias)
    return h[:b, :f]


def siamese_lstm_forward(caption, emb_table, w_ih, w_hh, b_ih, b_hh, *,
                         mxu_dtype=jnp.bfloat16):
    """caption: (S, B) int32.  Returns hiddens[0]: (B, F) — SiameseLSTM.forward."""
    # TODO(synk): at large S*B*F, fold this gather into the kernel via
    # PrefetchScalarGridSpec + pl.Element row gather (saves another HBM round
    # trip, biggest payoff on v5e); at small scale it is plain-JAX glue.
    embedded = jnp.take(emb_table, caption, axis=0)        # (S, B, F) f32
    return lstm_final_hidden(embedded, w_ih, w_hh, b_ih, b_hh,
                             mxu_dtype=mxu_dtype)


# ---------------------------------------------------------------------------
# Pure-JAX reference (PyTorch LSTM semantics) for validation
# ---------------------------------------------------------------------------
def _reference_forward(caption, emb_table, w_ih, w_hh, b_ih, b_hh):
    embedded = jnp.take(emb_table, caption, axis=0)
    S, B, F = embedded.shape
    h0 = jnp.zeros((B, F), jnp.float32)
    c0 = jnp.zeros((B, F), jnp.float32)

    def step(carry, x_t):
        h, c = carry
        gates = x_t @ w_ih.T + h @ w_hh.T + b_ih + b_hh
        i = jax.nn.sigmoid(gates[:, 0 * F:1 * F])
        f = jax.nn.sigmoid(gates[:, 1 * F:2 * F])
        g = jnp.tanh(gates[:, 2 * F:3 * F])
        o = jax.nn.sigmoid(gates[:, 3 * F:4 * F])
        c = f * c + i * g
        h = o * jnp.tanh(c)
        return (h, c), None

    (h, _), _ = jax.lax.scan(step, (h0, c0), embedded)
    return h


if __name__ == "__main__":
    vocab_size = 64
    feature_size = 32
    seq_len = 8
    batch = 8

    key = jax.random.PRNGKey(0)
    k_emb, k_wih, k_whh, k_bih, k_bhh, k_cap = jax.random.split(key, 6)

    bound = 1.0 / jnp.sqrt(feature_size)
    emb_table = jax.random.normal(k_emb, (vocab_size, feature_size), jnp.float32)
    w_ih = jax.random.uniform(k_wih, (4 * feature_size, feature_size),
                              jnp.float32, -bound, bound)
    w_hh = jax.random.uniform(k_whh, (4 * feature_size, feature_size),
                              jnp.float32, -bound, bound)
    b_ih = jax.random.uniform(k_bih, (4 * feature_size,), jnp.float32, -bound, bound)
    b_hh = jax.random.uniform(k_bhh, (4 * feature_size,), jnp.float32, -bound, bound)

    caption = jax.random.randint(k_cap, (seq_len, batch), 0, vocab_size,
                                 dtype=jnp.int32)

    ref = _reference_forward(caption, emb_table, w_ih, w_hh, b_ih, b_hh)

    # Default bf16-MXU path (operands bf16, accumulation/gate math f32).
    out_bf16 = siamese_lstm_forward(caption, emb_table, w_ih, w_hh, b_ih, b_hh)
    out_bf16 = jax.block_until_ready(out_bf16)
    assert out_bf16.shape == (batch, feature_size)
    assert jnp.allclose(out_bf16, ref, atol=3e-2, rtol=3e-2), \
        "bf16-MXU path mismatch vs reference"

    # Full f32 path reproduces PyTorch semantics tightly.
    out_f32 = siamese_lstm_forward(caption, emb_table, w_ih, w_hh, b_ih, b_hh,
                                   mxu_dtype=jnp.float32)
    out_f32 = jax.block_until_ready(out_f32)
    assert jnp.allclose(out_f32, ref, atol=1e-4, rtol=1e-4), \
        "f32 path mismatch vs reference"

    print("KERNEL_OK")
</pallas_src>

<mosaic_0001>
module attributes {stable_mosaic.version = 11 : i64} {
  func.func @_lstm_fused_kernel(%arg0: i32, %arg1: i32, %arg2: memref<8x8x128xbf16, #tpu.memory_space<vmem>>, %arg3: memref<128x512xbf16, #tpu.memory_space<vmem>>, %arg4: memref<128x512xbf16, #tpu.memory_space<vmem>>, %arg5: memref<1x512xf32, #tpu.memory_space<vmem>>, %arg6: memref<8x128xf32, #tpu.memory_space<vmem>>, %arg7: memref<8x8x512xf32, #tpu.memory_space<vmem>>, %arg8: memref<8x128xf32, #tpu.memory_space<vmem>>, %arg9: memref<8x128xf32, #tpu.memory_space<vmem>>) attributes {dimension_semantics = [#tpu.dimension_semantics<parallel>, #tpu.dimension_semantics<arbitrary>], iteration_bounds = array<i64: 1, 1>, scalar_prefetch = 0 : i64, scratch_operands = 3 : i64, tpu.core_type = #tpu.core_type<tc>, window_params = [{transform_indices = @transform_0, window_bounds = array<i64: 8, 8, 128>}, {pipeline_mode = #tpu.pipeline_mode<synchronous>, transform_indices = @transform_1, window_bounds = array<i64: 128, 512>}, {pipeline_mode = #tpu.pipeline_mode<synchronous>, transform_indices = @transform_2, window_bounds = array<i64: 128, 512>}, {pipeline_mode = #tpu.pipeline_mode<synchronous>, transform_indices = @transform_3, window_bounds = array<i64: 1, 512>}, {transform_indices = @transform_4, window_bounds = array<i64: 8, 128>}]} {
    %c0_i32 = arith.constant 0 : i32
    %0 = arith.cmpi eq, %arg1, %c0_i32 : i32
    %1 = arith.extui %0 : i1 to i32
    %c0_i32_0 = arith.constant 0 : i32
    %2 = arith.cmpi ne, %1, %c0_i32_0 : i32
    scf.if %2 {
      %cst_85 = arith.constant 0.000000e+00 : f32
      %275 = vector.broadcast %cst_85 : f32 to vector<8x128xf32>
      %c0_86 = arith.constant 0 : index
      %c0_87 = arith.constant 0 : index
      %276 = vector.load %arg8[%c0_86, %c0_87] : memref<8x128xf32, #tpu.memory_space<vmem>>, vector<8x128xf32>
      tpu.vector_store %arg8[%c0_86, %c0_87], %275 {strides = array<i32>} : memref<8x128xf32, #tpu.memory_space<vmem>>, vector<8x128xf32>,
      %cst_88 = arith.constant 0.000000e+00 : f32
      %277 = vector.broadcast %cst_88 : f32 to vector<8x128xf32>
      %c0_89 = arith.constant 0 : index
      %c0_90 = arith.constant 0 : index
      %278 = vector.load %arg9[%c0_89, %c0_90] : memref<8x128xf32, #tpu.memory_space<vmem>>, vector<8x128xf32>
      tpu.vector_store %arg9[%c0_89, %c0_90], %277 {strides = array<i32>} : memref<8x128xf32, #tpu.memory_space<vmem>>, vector<8x128xf32>,
    } else {
    }
    %c0 = arith.constant 0 : index
    %c0_1 = arith.constant 0 : index
    %c0_2 = arith.constant 0 : index
    %3 = vector.load %arg2[%c0, %c0_1, %c0_2] : memref<8x8x128xbf16, #tpu.memory_space<vmem>>, vector<8x8x128xbf16>
    %4 = vector.shape_cast %3 : vector<8x8x128xbf16> to vector<64x128xbf16>
    %c0_3 = arith.constant 0 : index
    %c0_4 = arith.constant 0 : index
    %5 = vector.load %arg3[%c0_3, %c0_4] : memref<128x512xbf16, #tpu.memory_space<vmem>>, vector<128x512xbf16>
    %cst = arith.constant dense<0.000000e+00> : vector<64x512xf32>
    %6 = tpu.matmul %4, %5, %cst {dimension_numbers = #tpu.dot_dimension_numbers<[1], [0], [0], [1], [0, 0, 1, 1], [], []>} : vector<64x128xbf16>, vector<128x512xbf16>, vector<64x512xf32> -> vector<64x512xf32>
    %c0_5 = arith.constant 0 : index
    %c0_6 = arith.constant 0 : index
    %7 = vector.load %arg5[%c0_5, %c0_6] : memref<1x512xf32, #tpu.memory_space<vmem>>, vector<1x512xf32>
    %8 = vector.broadcast %7 : vector<1x512xf32> to vector<64x512xf32>
    %9 = arith.addf %6, %8 : vector<64x512xf32>
    %10 = vector.shape_cast %9 : vector<64x512xf32> to vector<8x8x512xf32>
    %c0_7 = arith.constant 0 : index
    %c0_8 = arith.constant 0 : index
    %c0_9 = arith.constant 0 : index
    %11 = vector.load %arg7[%c0_7, %c0_8, %c0_9] : memref<8x8x512xf32, #tpu.memory_space<vmem>>, vector<8x8x512xf32>
    tpu.vector_store %arg7[%c0_7, %c0_8, %c0_9], %10 {strides = array<i32>} : memref<8x8x512xf32, #tpu.memory_space<vmem>>, vector<8x8x512xf32>,
    %c0_10 = arith.constant 0 : index
    %c0_11 = arith.constant 0 : index
    %12 = vector.load %arg8[%c0_10, %c0_11] : memref<8x128xf32, #tpu.memory_space<vmem>>, vector<8x128xf32>
    %c0_12 = arith.constant 0 : index
    %c0_13 = arith.constant 0 : index
    %13 = vector.load %arg9[%c0_12, %c0_13] : memref<8x128xf32, #tpu.memory_space<vmem>>, vector<8x128xf32>
    %c0_i32_14 = arith.constant 0 : i32
    %14 = arith.index_cast %c0_i32_14 : i32 to index
    %c0_15 = arith.constant 0 : index
    %c0_16 = arith.constant 0 : index
    %15 = vector.load %arg7[%14, %c0_15, %c0_16] : memref<8x8x512xf32, #tpu.memory_space<vmem>>, vector<1x8x512xf32>
    %16 = vector.shape_cast %15 : vector<1x8x512xf32> to vector<8x512xf32>
    %17 = arith.truncf %12 : vector<8x128xf32> to vector<8x128xbf16>
    %c0_17 = arith.constant 0 : index
    %c0_18 = arith.constant 0 : index
    %18 = vector.load %arg4[%c0_17, %c0_18] : memref<128x512xbf16, #tpu.memory_space<vmem>>, vector<128x512xbf16>
    %cst_19 = arith.constant dense<0.000000e+00> : vector<8x512xf32>
    %19 = tpu.matmul %17, %18, %cst_19 {dimension_numbers = #tpu.dot_dimension_numbers<[1], [0], [0], [1], [0, 0, 1, 1], [], []>} : vector<8x128xbf16>, vector<128x512xbf16>, vector<8x512xf32> -> vector<8x512xf32>
    %20 = arith.addf %16, %19 : vector<8x512xf32>
    %21 = vector.extract_strided_slice %20 {offsets = [0, 0], sizes = [8, 128], strides = [1, 1]} : vector<8x512xf32> to vector<8x128xf32>
    %22 = arith.negf %21 : vector<8x128xf32>
    %23 = math.exp %22 : vector<8x128xf32>
    %cst_20 = arith.constant 1.000000e+00 : f32
    %24 = vector.broadcast %cst_20 : f32 to vector<8x128xf32>
    %25 = arith.addf %24, %23 : vector<8x128xf32>
    %26 = arith.divf %24, %25 : vector<8x128xf32>
    %27 = vector.extract_strided_slice %20 {offsets = [0, 128], sizes = [8, 128], strides = [1, 1]} : vector<8x512xf32> to vector<8x128xf32>
    %28 = arith.negf %27 : vector<8x128xf32>
    %29 = math.exp %28 : vector<8x128xf32>
    %cst_21 = arith.constant 1.000000e+00 : f32
    %30 = vector.broadcast %cst_21 : f32 to vector<8x128xf32>
    %31 = arith.addf %30, %29 : vector<8x128xf32>
    %32 = arith.divf %30, %31 : vector<8x128xf32>
    %33 = vector.extract_strided_slice %20 {offsets = [0, 256], sizes = [8, 128], strides = [1, 1]} : vector<8x512xf32> to vector<8x128xf32>
    %34 = math.tanh %33 : vector<8x128xf32>
    %35 = vector.extract_strided_slice %20 {offsets = [0, 384], sizes = [8, 128], strides = [1, 1]} : vector<8x512xf32> to vector<8x128xf32>
    %36 = arith.negf %35 : vector<8x128xf32>
    %37 = math.exp %36 : vector<8x128xf32>
    %cst_22 = arith.constant 1.000000e+00 : f32
    %38 = vector.broadcast %cst_22 : f32 to vector<8x128xf32>
    %39 = arith.addf %38, %37 : vector<8x128xf32>
    %40 = arith.divf %38, %39 : vector<8x128xf32>
    %41 = arith.mulf %32, %13 : vector<8x128xf32>
    %42 = arith.mulf %26, %34 : vector<8x128xf32>
    %43 = arith.addf %41, %42 : vector<8x128xf32>
    %44 = math.tanh %43 : vector<8x128xf32>
    %45 = arith.mulf %40, %44 : vector<8x128xf32>
    %c1_i32 = arith.constant 1 : i32
    %46 = arith.index_cast %c1_i32 : i32 to index
    %c0_23 = arith.constant 0 : index
    %c0_24 = arith.constant 0 : index
    %47 = vector.load %arg7[%46, %c0_23, %c0_24] : memref<8x8x512xf32, #tpu.memory_space<vmem>>, vector<1x8x512xf32>
    %48 = vector.shape_cast %47 : vector<1x8x512xf32> to vector<8x512xf32>
    %49 = arith.truncf %45 : vector<8x128xf32> to vector<8x128xbf16>
    %c0_25 = arith.constant 0 : index
    %c0_26 = arith.constant 0 : index
    %50 = vector.load %arg4[%c0_25, %c0_26] : memref<128x512xbf16, #tpu.memory_space<vmem>>, vector<128x512xbf16>
    %cst_27 = arith.constant dense<0.000000e+00> : vector<8x512xf32>
    %51 = tpu.matmul %49, %50, %cst_27 {dimension_numbers = #tpu.dot_dimension_numbers<[1], [0], [0], [1], [0, 0, 1, 1], [], []>} : vector<8x128xbf16>, vector<128x512xbf16>, vector<8x512xf32> -> vector<8x512xf32>
    %52 = arith.addf %48, %51 : vector<8x512xf32>
    %53 = vector.extract_strided_slice %52 {offsets = [0, 0], sizes = [8, 128], strides = [1, 1]} : vector<8x512xf32> to vector<8x128xf32>
    %54 = arith.negf %53 : vector<8x128xf32>
    %55 = math.exp %54 : vector<8x128xf32>
    %cst_28 = arith.constant 1.000000e+00 : f32
    %56 = vector.broadcast %cst_28 : f32 to vector<8x128xf32>
    %57 = arith.addf %56, %55 : vector<8x128xf32>
    %58 = arith.divf %56, %57 : vector<8x128xf32>
    %59 = vector.extract_strided_slice %52 {offsets = [0, 128], sizes = [8, 128], strides = [1, 1]} : vector<8x512xf32> to vector<8x128xf32>
    %60 = arith.negf %59 : vector<8x128xf32>
    %61 = math.exp %60 : vector<8x128xf32>
    %cst_29 = arith.constant 1.000000e+00 : f32
    %62 = vector.broadcast %cst_29 : f32 to vector<8x128xf32>
    %63 = arith.addf %62, %61 : vector<8x128xf32>
    %64 = arith.divf %62, %63 : vector<8x128xf32>
    %65 = vector.extract_strided_slice %52 {offsets = [0, 256], sizes = [8, 128], strides = [1, 1]} : vector<8x512xf32> to vector<8x128xf32>
    %66 = math.tanh %65 : vector<8x128xf32>
    %67 = vector.extract_strided_slice %52 {offsets = [0, 384], sizes = [8, 128], strides = [1, 1]} : vector<8x512xf32> to vector<8x128xf32>
    %68 = arith.negf %67 : vector<8x128xf32>
    %69 = math.exp %68 : vector<8x128xf32>
    %cst_30 = arith.constant 1.000000e+00 : f32
    %70 = vector.broadcast %cst_30 : f32 to vector<8x128xf32>
    %71 = arith.addf %70, %69 : vector<8x128xf32>
    %72 = arith.divf %70, %71 : vector<8x128xf32>
    %73 = arith.mulf %64, %43 : vector<8x128xf32>
    %74 = arith.mulf %58, %66 : vector<8x128xf32>
    %75 = arith.addf %73, %74 : vector<8x128xf32>
    %76 = math.tanh %75 : vector<8x128xf32>
    %77 = arith.mulf %72, %76 : vector<8x128xf32>
    %c2_i32 = arith.constant 2 : i32
    %78 = arith.index_cast %c2_i32 : i32 to index
    %c0_31 = arith.constant 0 : index
    %c0_32 = arith.constant 0 : index
    %79 = vector.load %arg7[%78, %c0_31, %c0_32] : memref<8x8x512xf32, #tpu.memory_space<vmem>>, vector<1x8x512xf32>
    %80 = vector.shape_cast %79 : vector<1x8x512xf32> to vector<8x512xf32>
    %81 = arith.truncf %77 : vector<8x128xf32> to vector<8x128xbf16>
    %c0_33 = arith.constant 0 : index
    %c0_34 = arith.constant 0 : index
    %82 = vector.load %arg4[%c0_33, %c0_34] : memref<128x512xbf16, #tpu.memory_space<vmem>>, vector<128x512xbf16>
    %cst_35 = arith.constant dense<0.000000e+00> : vector<8x512xf32>
    %83 = tpu.matmul %81, %82, %cst_35 {dimension_numbers = #tpu.dot_dimension_numbers<[1], [0], [0], [1], [0, 0, 1, 1], [], []>} : vector<8x128xbf16>, vector<128x512xbf16>, vector<8x512xf32> -> vector<8x512xf32>
    %84 = arith.addf %80, %83 : vector<8x512xf32>
    %85 = vector.extract_strided_slice %84 {offsets = [0, 0], sizes = [8, 128], strides = [1, 1]} : vector<8x512xf32> to vector<8x128xf32>
    %86 = arith.negf %85 : vector<8x128xf32>
    %87 = math.exp %86 : vector<8x128xf32>
    %cst_36 = arith.constant 1.000000e+00 : f32
    %88 = vector.broadcast %cst_36 : f32 to vector<8x128xf32>
    %89 = arith.addf %88, %87 : vector<8x128xf32>
    %90 = arith.divf %88, %89 : vector<8x128xf32>
    %91 = vector.extract_strided_slice %84 {offsets = [0, 128], sizes = [8, 128], strides = [1, 1]} : vector<8x512xf32> to vector<8x128xf32>
    %92 = arith.negf %91 : vector<8x128xf32>
    %93 = math.exp %92 : vector<8x128xf32>
    %cst_37 = arith.constant 1.000000e+00 : f32
    %94 = vector.broadcast %cst_37 : f32 to vector<8x128xf32>
    %95 = arith.addf %94, %93 : vector<8x128xf32>
    %96 = arith.divf %94, %95 : vector<8x128xf32>
    %97 = vector.extract_strided_slice %84 {offsets = [0, 256], sizes = [8, 128], strides = [1, 1]} : vector<8x512xf32> to vector<8x128xf32>
    %98 = math.tanh %97 : vector<8x128xf32>
    %99 = vector.extract_strided_slice %84 {offsets = [0, 384], sizes = [8, 128], strides = [1, 1]} : vector<8x512xf32> to vector<8x128xf32>
    %100 = arith.negf %99 : vector<8x128xf32>
    %101 = math.exp %100 : vector<8x128xf32>
    %cst_38 = arith.constant 1.000000e+00 : f32
    %102 = vector.broadcast %cst_38 : f32 to vector<8x128xf32>
    %103 = arith.addf %102, %101 : vector<8x128xf32>
    %104 = arith.divf %102, %103 : vector<8x128xf32>
    %105 = arith.mulf %96, %75 : vector<8x128xf32>
    %106 = arith.mulf %90, %98 : vector<8x128xf32>
    %107 = arith.addf %105, %106 : vector<8x128xf32>
    %108 = math.tanh %107 : vector<8x128xf32>
    %109 = arith.mulf %104, %108 : vector<8x128xf32>
    %c3_i32 = arith.constant 3 : i32
    %110 = arith.index_cast %c3_i32 : i32 to index
    %c0_39 = arith.constant 0 : index
    %c0_40 = arith.constant 0 : index
    %111 = vector.load %arg7[%110, %c0_39, %c0_40] : memref<8x8x512xf32, #tpu.memory_space<vmem>>, vector<1x8x512xf32>
    %112 = vector.shape_cast %111 : vector<1x8x512xf32> to vector<8x512xf32>
    %113 = arith.truncf %109 : vector<8x128xf32> to vector<8x128xbf16>
    %c0_41 = arith.constant 0 : index
    %c0_42 = arith.constant 0 : index
    %114 = vector.load %arg4[%c0_41, %c0_42] : memref<128x512xbf16, #tpu.memory_space<vmem>>, vector<128x512xbf16>
    %cst_43 = arith.constant dense<0.000000e+00> : vector<8x512xf32>
    %115 = tpu.matmul %113, %114, %cst_43 {dimension_numbers = #tpu.dot_dimension_numbers<[1], [0], [0], [1], [0, 0, 1, 1], [], []>} : vector<8x128xbf16>, vector<128x512xbf16>, vector<8x512xf32> -> vector<8x512xf32>
    %116 = arith.addf %112, %115 : vector<8x512xf32>
    %117 = vector.extract_strided_slice %116 {offsets = [0, 0], sizes = [8, 128], strides = [1, 1]} : vector<8x512xf32> to vector<8x128xf32>
    %118 = arith.negf %117 : vector<8x128xf32>
    %119 = math.exp %118 : vector<8x128xf32>
    %cst_44 = arith.constant 1.000000e+00 : f32
    %120 = vector.broadcast %cst_44 : f32 to vector<8x128xf32>
    %121 = arith.addf %120, %119 : vector<8x128xf32>
    %122 = arith.divf %120, %121 : vector<8x128xf32>
    %123 = vector.extract_strided_slice %116 {offsets = [0, 128], sizes = [8, 128], strides = [1, 1]} : vector<8x512xf32> to vector<8x128xf32>
    %124 = arith.negf %123 : vector<8x128xf32>
    %125 = math.exp %124 : vector<8x128xf32>
    %cst_45 = arith.constant 1.000000e+00 : f32
    %126 = vector.broadcast %cst_45 : f32 to vector<8x128xf32>
    %127 = arith.addf %126, %125 : vector<8x128xf32>
    %128 = arith.divf %126, %127 : vector<8x128xf32>
    %129 = vector.extract_strided_slice %116 {offsets = [0, 256], sizes = [8, 128], strides = [1, 1]} : vector<8x512xf32> to vector<8x128xf32>
    %130 = math.tanh %129 : vector<8x128xf32>
    %131 = vector.extract_strided_slice %116 {offsets = [0, 384], sizes = [8, 128], strides = [1, 1]} : vector<8x512xf32> to vector<8x128xf32>
    %132 = arith.negf %131 : vector<8x128xf32>
    %133 = math.exp %132 : vector<8x128xf32>
    %cst_46 = arith.constant 1.000000e+00 : f32
    %134 = vector.broadcast %cst_46 : f32 to vector<8x128xf32>
    %135 = arith.addf %134, %133 : vector<8x128xf32>
    %136 = arith.divf %134, %135 : vector<8x128xf32>
    %137 = arith.mulf %128, %107 : vector<8x128xf32>
    %138 = arith.mulf %122, %130 : vector<8x128xf32>
    %139 = arith.addf %137, %138 : vector<8x128xf32>
    %140 = math.tanh %139 : vector<8x128xf32>
    %141 = arith.mulf %136, %140 : vector<8x128xf32>
    %c4_i32 = arith.constant 4 : i32
    %142 = arith.index_cast %c4_i32 : i32 to index
    %c0_47 = arith.constant 0 : index
    %c0_48 = arith.constant 0 : index
    %143 = vector.load %arg7[%142, %c0_47, %c0_48] : memref<8x8x512xf32, #tpu.memory_space<vmem>>, vector<1x8x512xf32>
    %144 = vector.shape_cast %143 : vector<1x8x512xf32> to vector<8x512xf32>
    %145 = arith.truncf %141 : vector<8x128xf32> to vector<8x128xbf16>
    %c0_49 = arith.constant 0 : index
    %c0_50 = arith.constant 0 : index
    %146 = vector.load %arg4[%c0_49, %c0_50] : memref<128x512xbf16, #tpu.memory_space<vmem>>, vector<128x512xbf16>
    %cst_51 = arith.constant dense<0.000000e+00> : vector<8x512xf32>
    %147 = tpu.matmul %145, %146, %cst_51 {dimension_numbers = #tpu.dot_dimension_numbers<[1], [0], [0], [1], [0, 0, 1, 1], [], []>} : vector<8x128xbf16>, vector<128x512xbf16>, vector<8x512xf32> -> vector<8x512xf32>
    %148 = arith.addf %144, %147 : vector<8x512xf32>
    %149 = vector.extract_strided_slice %148 {offsets = [0, 0], sizes = [8, 128], strides = [1, 1]} : vector<8x512xf32> to vector<8x128xf32>
    %150 = arith.negf %149 : vector<8x128xf32>
    %151 = math.exp %150 : vector<8x128xf32>
    %cst_52 = arith.constant 1.000000e+00 : f32
    %152 = vector.broadcast %cst_52 : f32 to vector<8x128xf32>
    %153 = arith.addf %152, %151 : vector<8x128xf32>
    %154 = arith.divf %152, %153 : vector<8x128xf32>
    %155 = vector.extract_strided_slice %148 {offsets = [0, 128], sizes = [8, 128], strides = [1, 1]} : vector<8x512xf32> to vector<8x128xf32>
    %156 = arith.negf %155 : vector<8x128xf32>
    %157 = math.exp %156 : vector<8x128xf32>
    %cst_53 = arith.constant 1.000000e+00 : f32
    %158 = vector.broadcast %cst_53 : f32 to vector<8x128xf32>
    %159 = arith.addf %158, %157 : vector<8x128xf32>
    %160 = arith.divf %158, %159 : vector<8x128xf32>
    %161 = vector.extract_strided_slice %148 {offsets = [0, 256], sizes = [8, 128], strides = [1, 1]} : vector<8x512xf32> to vector<8x128xf32>
    %162 = math.tanh %161 : vector<8x128xf32>
    %163 = vector.extract_strided_slice %148 {offsets = [0, 384], sizes = [8, 128], strides = [1, 1]} : vector<8x512xf32> to vector<8x128xf32>
    %164 = arith.negf %163 : vector<8x128xf32>
    %165 = math.exp %164 : vector<8x128xf32>
    %cst_54 = arith.constant 1.000000e+00 : f32
    %166 = vector.broadcast %cst_54 : f32 to vector<8x128xf32>
    %167 = arith.addf %166, %165 : vector<8x128xf32>
    %168 = arith.divf %166, %167 : vector<8x128xf32>
    %169 = arith.mulf %160, %139 : vector<8x128xf32>
    %170 = arith.mulf %154, %162 : vector<8x128xf32>
    %171 = arith.addf %169, %170 : vector<8x128xf32>
    %172 = math.tanh %171 : vector<8x128xf32>
    %173 = arith.mulf %168, %172 : vector<8x128xf32>
    %c5_i32 = arith.constant 5 : i32
    %174 = arith.index_cast %c5_i32 : i32 to index
    %c0_55 = arith.constant 0 : index
    %c0_56 = arith.constant 0 : index
    %175 = vector.load %arg7[%174, %c0_55, %c0_56] : memref<8x8x512xf32, #tpu.memory_space<vmem>>, vector<1x8x512xf32>
    %176 = vector.shape_cast %175 : vector<1x8x512xf32> to vector<8x512xf32>
    %177 = arith.truncf %173 : vector<8x128xf32> to vector<8x128xbf16>
    %c0_57 = arith.constant 0 : index
    %c0_58 = arith.constant 0 : index
    %178 = vector.load %arg4[%c0_57, %c0_58] : memref<128x512xbf16, #tpu.memory_space<vmem>>, vector<128x512xbf16>
    %cst_59 = arith.constant dense<0.000000e+00> : vector<8x512xf32>
    %179 = tpu.matmul %177, %178, %cst_59 {dimension_numbers = #tpu.dot_dimension_numbers<[1], [0], [0], [1], [0, 0, 1, 1], [], []>} : vector<8x128xbf16>, vector<128x512xbf16>, vector<8x512xf32> -> vector<8x512xf32>
    %180 = arith.addf %176, %179 : vector<8x512xf32>
    %181 = vector.extract_strided_slice %180 {offsets = [0, 0], sizes = [8, 128], strides = [1, 1]} : vector<8x512xf32> to vector<8x128xf32>
    %182 = arith.negf %181 : vector<8x128xf32>
    %183 = math.exp %182 : vector<8x128xf32>
    %cst_60 = arith.constant 1.000000e+00 : f32
    %184 = vector.broadcast %cst_60 : f32 to vector<8x128xf32>
    %185 = arith.addf %184, %183 : vector<8x128xf32>
    %186 = arith.divf %184, %185 : vector<8x128xf32>
    %187 = vector.extract_strided_slice %180 {offsets = [0, 128], sizes = [8, 128], strides = [1, 1]} : vector<8x512xf32> to vector<8x128xf32>
    %188 = arith.negf %187 : vector<8x128xf32>
    %189 = math.exp %188 : vector<8x128xf32>
    %cst_61 = arith.constant 1.000000e+00 : f32
    %190 = vector.broadcast %cst_61 : f32 to vector<8x128xf32>
    %191 = arith.addf %190, %189 : vector<8x128xf32>
    %192 = arith.divf %190, %191 : vector<8x128xf32>
    %193 = vector.extract_strided_slice %180 {offsets = [0, 256], sizes = [8, 128], strides = [1, 1]} : vector<8x512xf32> to vector<8x128xf32>
    %194 = math.tanh %193 : vector<8x128xf32>
    %195 = vector.extract_strided_slice %180 {offsets = [0, 384], sizes = [8, 128], strides = [1, 1]} : vector<8x512xf32> to vector<8x128xf32>
    %196 = arith.negf %195 : vector<8x128xf32>
    %197 = math.exp %196 : vector<8x128xf32>
    %cst_62 = arith.constant 1.000000e+00 : f32
    %198 = vector.broadcast %cst_62 : f32 to vector<8x128xf32>
    %199 = arith.addf %198, %197 : vector<8x128xf32>
    %200 = arith.divf %198, %199 : vector<8x128xf32>
    %201 = arith.mulf %192, %171 : vector<8x128xf32>
    %202 = arith.mulf %186, %194 : vector<8x128xf32>
    %203 = arith.addf %201, %202 : vector<8x128xf32>
    %204 = math.tanh %203 : vector<8x128xf32>
    %205 = arith.mulf %200, %204 : vector<8x128xf32>
    %c6_i32 = arith.constant 6 : i32
    %206 = arith.index_cast %c6_i32 : i32 to index
    %c0_63 = arith.constant 0 : index
    %c0_64 = arith.constant 0 : index
    %207 = vector.load %arg7[%206, %c0_63, %c0_64] : memref<8x8x512xf32, #tpu.memory_space<vmem>>, vector<1x8x512xf32>
    %208 = vector.shape_cast %207 : vector<1x8x512xf32> to vector<8x512xf32>
    %209 = arith.truncf %205 : vector<8x128xf32> to vector<8x128xbf16>
    %c0_65 = arith.constant 0 : index
    %c0_66 = arith.constant 0 : index
    %210 = vector.load %arg4[%c0_65, %c0_66] : memref<128x512xbf16, #tpu.memory_space<vmem>>, vector<128x512xbf16>
    %cst_67 = arith.constant dense<0.000000e+00> : vector<8x512xf32>
    %211 = tpu.matmul %209, %210, %cst_67 {dimension_numbers = #tpu.dot_dimension_numbers<[1], [0], [0], [1], [0, 0, 1, 1], [], []>} : vector<8x128xbf16>, vector<128x512xbf16>, vector<8x512xf32> -> vector<8x512xf32>
    %212 = arith.addf %208, %211 : vector<8x512xf32>
    %213 = vector.extract_strided_slice %212 {offsets = [0, 0], sizes = [8, 128], strides = [1, 1]} : vector<8x512xf32> to vector<8x128xf32>
    %214 = arith.negf %213 : vector<8x128xf32>
    %215 = math.exp %214 : vector<8x128xf32>
    %cst_68 = arith.constant 1.000000e+00 : f32
    %216 = vector.broadcast %cst_68 : f32 to vector<8x128xf32>
    %217 = arith.addf %216, %215 : vector<8x128xf32>
    %218 = arith.divf %216, %217 : vector<8x128xf32>
    %219 = vector.extract_strided_slice %212 {offsets = [0, 128], sizes = [8, 128], strides = [1, 1]} : vector<8x512xf32> to vector<8x128xf32>
    %220 = arith.negf %219 : vector<8x128xf32>
    %221 = math.exp %220 : vector<8x128xf32>
    %cst_69 = arith.constant 1.000000e+00 : f32
    %222 = vector.broadcast %cst_69 : f32 to vector<8x128xf32>
    %223 = arith.addf %222, %221 : vector<8x128xf32>
    %224 = arith.divf %222, %223 : vector<8x128xf32>
    %225 = vector.extract_strided_slice %212 {offsets = [0, 256], sizes = [8, 128], strides = [1, 1]} : vector<8x512xf32> to vector<8x128xf32>
    %226 = math.tanh %225 : vector<8x128xf32>
    %227 = vector.extract_strided_slice %212 {offsets = [0, 384], sizes = [8, 128], strides = [1, 1]} : vector<8x512xf32> to vector<8x128xf32>
    %228 = arith.negf %227 : vector<8x128xf32>
    %229 = math.exp %228 : vector<8x128xf32>
    %cst_70 = arith.constant 1.000000e+00 : f32
    %230 = vector.broadcast %cst_70 : f32 to vector<8x128xf32>
    %231 = arith.addf %230, %229 : vector<8x128xf32>
    %232 = arith.divf %230, %231 : vector<8x128xf32>
    %233 = arith.mulf %224, %203 : vector<8x128xf32>
    %234 = arith.mulf %218, %226 : vector<8x128xf32>
    %235 = arith.addf %233, %234 : vector<8x128xf32>
    %236 = math.tanh %235 : vector<8x128xf32>
    %237 = arith.mulf %232, %236 : vector<8x128xf32>
    %c7_i32 = arith.constant 7 : i32
    %238 = arith.index_cast %c7_i32 : i32 to index
    %c0_71 = arith.constant 0 : index
    %c0_72 = arith.constant 0 : index
    %239 = vector.load %arg7[%238, %c0_71, %c0_72] : memref<8x8x512xf32, #tpu.memory_space<vmem>>, vector<1x8x512xf32>
    %240 = vector.shape_cast %239 : vector<1x8x512xf32> to vector<8x512xf32>
    %241 = arith.truncf %237 : vector<8x128xf32> to vector<8x128xbf16>
    %c0_73 = arith.constant 0 : index
    %c0_74 = arith.constant 0 : index
    %242 = vector.load %arg4[%c0_73, %c0_74] : memref<128x512xbf16, #tpu.memory_space<vmem>>, vector<128x512xbf16>
    %cst_75 = arith.constant dense<0.000000e+00> : vector<8x512xf32>
    %243 = tpu.matmul %241, %242, %cst_75 {dimension_numbers = #tpu.dot_dimension_numbers<[1], [0], [0], [1], [0, 0, 1, 1], [], []>} : vector<8x128xbf16>, vector<128x512xbf16>, vector<8x512xf32> -> vector<8x512xf32>
    %244 = arith.addf %240, %243 : vector<8x512xf32>
    %245 = vector.extract_strided_slice %244 {offsets = [0, 0], sizes = [8, 128], strides = [1, 1]} : vector<8x512xf32> to vector<8x128xf32>
    %246 = arith.negf %245 : vector<8x128xf32>
    %247 = math.exp %246 : vector<8x128xf32>
    %cst_76 = arith.constant 1.000000e+00 : f32
    %248 = vector.broadcast %cst_76 : f32 to vector<8x128xf32>
    %249 = arith.addf %248, %247 : vector<8x128xf32>
    %250 = arith.divf %248, %249 : vector<8x128xf32>
    %251 = vector.extract_strided_slice %244 {offsets = [0, 128], sizes = [8, 128], strides = [1, 1]} : vector<8x512xf32> to vector<8x128xf32>
    %252 = arith.negf %251 : vector<8x128xf32>
    %253 = math.exp %252 : vector<8x128xf32>
    %cst_77 = arith.constant 1.000000e+00 : f32
    %254 = vector.broadcast %cst_77 : f32 to vector<8x128xf32>
    %255 = arith.addf %254, %253 : vector<8x128xf32>
    %256 = arith.divf %254, %255 : vector<8x128xf32>
    %257 = vector.extract_strided_slice %244 {offsets = [0, 256], sizes = [8, 128], strides = [1, 1]} : vector<8x512xf32> to vector<8x128xf32>
    %258 = math.tanh %257 : vector<8x128xf32>
    %259 = vector.extract_strided_slice %244 {offsets = [0, 384], sizes = [8, 128], strides = [1, 1]} : vector<8x512xf32> to vector<8x128xf32>
    %260 = arith.negf %259 : vector<8x128xf32>
    %261 = math.exp %260 : vector<8x128xf32>
    %cst_78 = arith.constant 1.000000e+00 : f32
    %262 = vector.broadcast %cst_78 : f32 to vector<8x128xf32>
    %263 = arith.addf %262, %261 : vector<8x128xf32>
    %264 = arith.divf %262, %263 : vector<8x128xf32>
    %265 = arith.mulf %256, %235 : vector<8x128xf32>
    %266 = arith.mulf %250, %258 : vector<8x128xf32>
    %267 = arith.addf %265, %266 : vector<8x128xf32>
    %268 = math.tanh %267 : vector<8x128xf32>
    %269 = arith.mulf %264, %268 : vector<8x128xf32>
    %c8_i32 = arith.constant 8 : i32
    %c0_79 = arith.constant 0 : index
    %c0_80 = arith.constant 0 : index
    %270 = vector.load %arg8[%c0_79, %c0_80] : memref<8x128xf32, #tpu.memory_space<vmem>>, vector<8x128xf32>
    tpu.vector_store %arg8[%c0_79, %c0_80], %269 {strides = array<i32>} : memref<8x128xf32, #tpu.memory_space<vmem>>, vector<8x128xf32>,
    %c0_81 = arith.constant 0 : index
    %c0_82 = arith.constant 0 : index
    %271 = vector.load %arg9[%c0_81, %c0_82] : memref<8x128xf32, #tpu.memory_space<vmem>>, vector<8x128xf32>
    tpu.vector_store %arg9[%c0_81, %c0_82], %267 {strides = array<i32>} : memref<8x128xf32, #tpu.memory_space<vmem>>, vector<8x128xf32>,
    %c0_i32_83 = arith.constant 0 : i32
    %272 = arith.cmpi eq, %arg1, %c0_i32_83 : i32
    %273 = arith.extui %272 : i1 to i32
    %c0_i32_84 = arith.constant 0 : i32
    %274 = arith.cmpi ne, %273, %c0_i32_84 : i32
    scf.if %274 {
      %c0_85 = arith.constant 0 : index
      %c0_86 = arith.constant 0 : index
      %275 = vector.load %arg6[%c0_85, %c0_86] : memref<8x128xf32, #tpu.memory_space<vmem>>, vector<8x128xf32>
      tpu.vector_store %arg6[%c0_85, %c0_86], %269 {strides = array<i32>} : memref<8x128xf32, #tpu.memory_space<vmem>>, vector<8x128xf32>,
    } else {
    }
    return
  }
  func.func @transform_0(%arg0: i32, %arg1: i32) -> (i32, i32, i32) {
    %c0_i32 = arith.constant 0 : i32
    %c0_i32_0 = arith.constant 0 : i32
    return %arg1, %arg0, %c0_i32 : i32, i32, i32
  }
  func.func @transform_1(%arg0: i32, %arg1: i32) -> (i32, i32) {
    %c0_i32 = arith.constant 0 : i32
    %c0_i32_0 = arith.constant 0 : i32
    %c0_i32_1 = arith.constant 0 : i32
    return %c0_i32, %c0_i32_0 : i32, i32
  }
  func.func @transform_2(%arg0: i32, %arg1: i32) -> (i32, i32) {
    %c0_i32 = arith.constant 0 : i32
    %c0_i32_0 = arith.constant 0 : i32
    %c0_i32_1 = arith.constant 0 : i32
    return %c0_i32, %c0_i32_0 : i32, i32
  }
  func.func @transform_3(%arg0: i32, %arg1: i32) -> (i32, i32) {
    %c0_i32 = arith.constant 0 : i32
    %c0_i32_0 = arith.constant 0 : i32
    %c0_i32_1 = arith.constant 0 : i32
    return %c0_i32, %c0_i32_0 : i32, i32
  }
  func.func @transform_4(%arg0: i32, %arg1: i32) -> (i32, i32) {
    %c0_i32 = arith.constant 0 : i32
    %c0_i32_0 = arith.constant 0 : i32
    return %arg0, %c0_i32 : i32, i32
  }
}

</mosaic_0001>

<llo_original>
// kernel: tpu_custom_call.1
$region0: #{tpu_custom_call.1}
  #allocation0 [shape = 'u32[]', space=smem, size = 0x4, offset = 0x4, fixed_abs, tag = 'smem constant byte address 0x4 - core index']
  #allocation1 [shape = 'u32[144,128]{1,0:T(1,128)}', space=vmem, size = 0x12000, scoped, tag = 'internal scratch']
  #allocation2 [shape = 'f32[8,8,512]{2,1,0:T(8,128)}', space=vmem, size = 0x20000, scoped, tag = 'scratch operand']
  #allocation3 [shape = 'f32[8,128]{1,0:T(8,128)}', space=vmem, size = 0x1000, scoped, tag = 'scratch operand']
  #allocation4 [shape = 'f32[8,128]{1,0:T(8,128)}', space=vmem, size = 0x1000, scoped, tag = 'scratch operand']
  %s0 = inlined_call_operand.hbm [shape: bf16[8,8,128], index: 0, kind: input, shape index: {}]
  %s1 = inlined_call_operand.hbm [shape: bf16[128,512], index: 1, kind: input, shape index: {}]
  %s2 = inlined_call_operand.hbm [shape: bf16[128,512], index: 2, kind: input, shape index: {}]
  %s3 = inlined_call_operand.vmem [shape: f32[1,512], index: 3, kind: input, shape index: {}]
  %s4 = inlined_call_operand.hbm [shape: f32[8,128], index: 4, kind: output, shape index: {}]
  %s5 = sld [smem:[#allocation0]]
  $region46: #{tpu_custom_call.1} parent=0
    _
  %s7 = ssub.s32 1, %s5
  %s8 = scalar_select 0, %s7, %s5
  $region1: #{tpu_custom_call.1} parent=0
    #allocation5 [shape = 'u8[16384]{0}', space=vmem, size = 0x4000, scoped, tag = 'input window, operand 0, single buffered']
    #allocation6 [shape = 's32[1]{0}', space=sflag, size = 0x4, scoped, tag = 'scoped memory for tpu_custom_call.1']
    #allocation7 [shape = 's32[1]{0}', space=sflag, size = 0x4, scoped, tag = 'scoped memory for tpu_custom_call.1']
    #allocation8 [shape = 'u8[131072]{0}', space=vmem, size = 0x20000, scoped, tag = 'input window, operand 1, single buffered']
    #allocation9 [shape = 's32[1]{0}', space=sflag, size = 0x4, scoped, tag = 'scoped memory for tpu_custom_call.1']
    #allocation10 [shape = 'u8[131072]{0}', space=vmem, size = 0x20000, scoped, tag = 'input window, operand 2, single buffered']
    #allocation11 [shape = 'u8[4096]{0}', space=vmem, size = 0x1000, scoped, tag = 'output window, operand 0, single buffered']
    %9 = vsyncpa [#allocation6], 0
    %10 = vsyncpa [#allocation9], 0
    %11 = vsyncpa [#allocation7], 0
    // Predicated region
    $region2: #{tpu_custom_call.1} parent=1 // pred_check
      _
    $region3: #{tpu_custom_call.1} parent=1 // pred_check_branch
      %13 = sbr.rel (0) target = $region5
    $region4: #{tpu_custom_call.1} parent=1 // pred_region
      %s15 = ssub.s32 512, 512
      %16 = vsyncadd [#allocation6], %s15
      %s17 = sshll.u32 [#allocation5], 4
      %s18 = int_to_ptr.vmem [resolvable:$true] %s17
      %23 = dma.hbm_to_vmem [thread:$0]  %s0, 512, %s18, [#allocation6], 64, 64, 4
    $region5: #{tpu_custom_call.1} parent=1 // pred_fallthru
      _
    // Predicated region
    $region6: #{tpu_custom_call.1} parent=1 // pred_check
      _
    $region7: #{tpu_custom_call.1} parent=1 // pred_check_branch
      %25 = sbr.rel (0) target = $region9
    $region8: #{tpu_custom_call.1} parent=1 // pred_region
      %s27 = ssub.s32 4096, 4096
      %28 = vsyncadd [#allocation9], %s27
      %s29 = sshll.u32 [#allocation8], 4
      %s30 = int_to_ptr.vmem [resolvable:$true] %s29
      %35 = dma.hbm_to_vmem [thread:$0]  %s1, 4096, %s30, [#allocation9], 256, 256, 16
    $region9: #{tpu_custom_call.1} parent=1 // pred_fallthru
      _
    // Predicated region
    $region10: #{tpu_custom_call.1} parent=1 // pred_check
      _
    $region11: #{tpu_custom_call.1} parent=1 // pred_check_branch
      %37 = sbr.rel (0) target = $region13
    $region12: #{tpu_custom_call.1} parent=1 // pred_region
      %s39 = ssub.s32 4096, 4096
      %40 = vsyncadd [#allocation9], %s39
      %s41 = sshll.u32 [#allocation10], 4
      %s42 = int_to_ptr.vmem [resolvable:$true] %s41
      %47 = dma.hbm_to_vmem [thread:$0]  %s2, 4096, %s42, [#allocation9], 256, 256, 16
    $region13: #{tpu_custom_call.1} parent=1 // pred_fallthru
      _
    // Predicated region
    $region14: #{tpu_custom_call.1} parent=1 // pred_check
      _
    $region15: #{tpu_custom_call.1} parent=1 // pred_check_branch
      %49 = sbr.rel (0) target = $region17
    $region16: #{tpu_custom_call.1} parent=1 // pred_region
      _
    $region17: #{tpu_custom_call.1} parent=1 // pred_fallthru
      _
    // Predicated region
    $region18: #{tpu_custom_call.1} parent=1 // pred_check
      _
    $region19: #{tpu_custom_call.1} parent=1 // pred_check_branch
      %51 = sbr.rel (0) target = $region21
    $region20: #{tpu_custom_call.1} parent=1 // pred_region
      %52 = dma.done [#allocation6], 512
    $region21: #{tpu_custom_call.1} parent=1 // pred_fallthru
      _
    // Predicated region
    $region22: #{tpu_custom_call.1} parent=1 // pred_check
      _
    $region23: #{tpu_custom_call.1} parent=1 // pred_check_branch
      %54 = sbr.rel (0) target = $region25
    $region24: #{tpu_custom_call.1} parent=1 // pred_region
      %55 = dma.done [#allocation9], 4096
    $region25: #{tpu_custom_call.1} parent=1 // pred_fallthru
      _
    // Predicated region
    $region26: #{tpu_custom_call.1} parent=1 // pred_check
      _
    $region27: #{tpu_custom_call.1} parent=1 // pred_check_branch
      %57 = sbr.rel (0) target = $region29
    $region28: #{tpu_custom_call.1} parent=1 // pred_region
      %58 = dma.done [#allocation9], 4096
    $region29: #{tpu_custom_call.1} parent=1 // pred_fallthru
      _
    %p60 = scmp.eq.s32.totalorder 0, 0
    // Predicated region
    $region30: #{tpu_custom_call.1} parent=1 // pred_check
      %p61 = pneg %p60
    $region31: #{tpu_custom_call.1} parent=1 // pred_check_branch
      %63 = sbr.rel (%p61) target = $region33
    $region32: #{tpu_custom_call.1} parent=1 // pred_region
      %64 = vst [vmem:[#allocation3] sm:$0xff] 0.0
      %65 = vst [vmem:[#allocation4] sm:$0xff] 0.0
    $region33: #{tpu_custom_call.1} parent=1 // pred_fallthru
      _
    %v66 = vld [vmem:[#allocation5] sm:$0xf]
    %v67 = vld [vmem:[#allocation5 + $0x4] sm:$0xf]
    %v68 = vld [vmem:[#allocation5 + $0x8] sm:$0xf]
    %v69 = vld [vmem:[#allocation5 + $0xc] sm:$0xf]
    %v70 = vld [vmem:[#allocation5 + $0x10] sm:$0xf]
    %v71 = vld [vmem:[#allocation5 + $0x14] sm:$0xf]
    %v72 = vld [vmem:[#allocation5 + $0x18] sm:$0xf]
    %v73 = vld [vmem:[#allocation5 + $0x1c] sm:$0xf]
    %v74 = vld [vmem:[#allocation8] sm:$0xff]
    %v75 = vld [vmem:[#allocation8 + $0x8] sm:$0xff]
    %v76 = vld [vmem:[#allocation8 + $0x10] sm:$0xff]
    %v77 = vld [vmem:[#allocation8 + $0x18] sm:$0xff]
    %v78 = vld [vmem:[#allocation8 + $0x20] sm:$0xff]
    %v79 = vld [vmem:[#allocation8 + $0x28] sm:$0xff]
    %v80 = vld [vmem:[#allocation8 + $0x30] sm:$0xff]
    %v81 = vld [vmem:[#allocation8 + $0x38] sm:$0xff]
    %v82 = vld [vmem:[#allocation8 + $0x40] sm:$0xff]
    %v83 = vld [vmem:[#allocation8 + $0x48] sm:$0xff]
    %v84 = vld [vmem:[#allocation8 + $0x50] sm:$0xff]
    %v85 = vld [vmem:[#allocation8 + $0x58] sm:$0xff]
    %v86 = vld [vmem:[#allocation8 + $0x60] sm:$0xff]
    %v87 = vld [vmem:[#allocation8 + $0x68] sm:$0xff]
    %v88 = vld [vmem:[#allocation8 + $0x70] sm:$0xff]
    %v89 = vld [vmem:[#allocation8 + $0x78] sm:$0xff]
    %v90 = vld [vmem:[#allocation8 + $0x80] sm:$0xff]
    %v91 = vld [vmem:[#allocation8 + $0x88] sm:$0xff]
    %v92 = vld [vmem:[#allocation8 + $0x90] sm:$0xff]
    %v93 = vld [vmem:[#allocation8 + $0x98] sm:$0xff]
    %v94 = vld [vmem:[#allocation8 + $0xa0] sm:$0xff]
    %v95 = vld [vmem:[#allocation8 + $0xa8] sm:$0xff]
    %v96 = vld [vmem:[#allocation8 + $0xb0] sm:$0xff]
    %v97 = vld [vmem:[#allocation8 + $0xb8] sm:$0xff]
    %v98 = vld [vmem:[#allocation8 + $0xc0] sm:$0xff]
    %v99 = vld [vmem:[#allocation8 + $0xc8] sm:$0xff]
    %v100 = vld [vmem:[#allocation8 + $0xd0] sm:$0xff]
    %v101 = vld [vmem:[#allocation8 + $0xd8] sm:$0xff]
    %v102 = vld [vmem:[#allocation8 + $0xe0] sm:$0xff]
    %v103 = vld [vmem:[#allocation8 + $0xe8] sm:$0xff]
    %v104 = vld [vmem:[#allocation8 + $0xf0] sm:$0xff]
    %v105 = vld [vmem:[#allocation8 + $0xf8] sm:$0xff]
    %v106 = vld [vmem:[%s3] sm:$0xf]
    %v108 = vlaneseq
    %v109 = vshrl.u32 %v108, 7
    %v110 = vsub.s32 0, %v109
    %v111 = vrot.slane %v106, %v110
    %v112 = vlaneseq
    %v113 = vshrl.u32 %v112, 7
    %v114 = vsub.s32 1, %v113
    %v115 = vrot.slane %v106, %v114
    %v116 = vlaneseq
    %v117 = vshrl.u32 %v116, 7
    %v118 = vsub.s32 2, %v117
    %v119 = vrot.slane %v106, %v118
    %v120 = vlaneseq
    %v121 = vshrl.u32 %v120, 7
    %v122 = vsub.s32 3, %v121
    %v123 = vrot.slane %v106, %v122
    %v136 = vunpack.c.l.b16 %v66
    %v137 = vunpack.c.l.b16 %v67
    %v138 = vunpack.c.l.b16 %v68
    %v139 = vunpack.c.l.b16 %v69
    %v140 = vunpack.c.l.b16 %v70
    %v141 = vunpack.c.l.b16 %v71
    %v142 = vunpack.c.l.b16 %v72
    %v143 = vunpack.c.l.b16 %v73
    %v144 = vpack.c.b16 %v137, %v136
    %v145 = vpack.c.b16 %v139, %v138
    %v146 = vpack.c.b16 %v141, %v140
    %v147 = vpack.c.b16 %v143, %v142
    %v184 = vunpack.c.l.b16 %v74
    %v185 = vunpack.c.h.b16 %v74
    %v186 = vunpack.c.l.b16 %v75
    %v187 = vunpack.c.h.b16 %v75
    %v188 = vunpack.c.l.b16 %v76
    %v189 = vunpack.c.h.b16 %v76
    %v190 = vunpack.c.l.b16 %v77
    %v191 = vunpack.c.h.b16 %v77
    %v192 = vunpack.c.l.b16 %v78
    %v193 = vunpack.c.h.b16 %v78
    %v194 = vunpack.c.l.b16 %v79
    %v195 = vunpack.c.h.b16 %v79
    %v196 = vunpack.c.l.b16 %v80
    %v197 = vunpack.c.h.b16 %v80
    %v198 = vunpack.c.l.b16 %v81
    %v199 = vunpack.c.h.b16 %v81
    %v200 = vunpack.c.l.b16 %v82
    %v201 = vunpack.c.h.b16 %v82
    %v202 = vunpack.c.l.b16 %v83
    %v203 = vunpack.c.h.b16 %v83
    %v204 = vunpack.c.l.b16 %v84
    %v205 = vunpack.c.h.b16 %v84
    %v206 = vunpack.c.l.b16 %v85
    %v207 = vunpack.c.h.b16 %v85
    %v208 = vunpack.c.l.b16 %v86
    %v209 = vunpack.c.h.b16 %v86
    %v210 = vunpack.c.l.b16 %v87
    %v211 = vunpack.c.h.b16 %v87
    %v212 = vunpack.c.l.b16 %v88
    %v213 = vunpack.c.h.b16 %v88
    %v214 = vunpack.c.l.b16 %v89
    %v215 = vunpack.c.h.b16 %v89
    %v216 = vunpack.c.l.b16 %v90
    %v217 = vunpack.c.h.b16 %v90
    %v218 = vunpack.c.l.b16 %v91
    %v219 = vunpack.c.h.b16 %v91
    %v220 = vunpack.c.l.b16 %v92
    %v221 = vunpack.c.h.b16 %v92
    %v222 = vunpack.c.l.b16 %v93
    %v223 = vunpack.c.h.b16 %v93
    %v224 = vunpack.c.l.b16 %v94
    %v225 = vunpack.c.h.b16 %v94
    %v226 = vunpack.c.l.b16 %v95
    %v227 = vunpack.c.h.b16 %v95
    %v228 = vunpack.c.l.b16 %v96
    %v229 = vunpack.c.h.b16 %v96
    %v230 = vunpack.c.l.b16 %v97
    %v231 = vunpack.c.h.b16 %v97
    %v232 = vunpack.c.l.b16 %v98
    %v233 = vunpack.c.h.b16 %v98
    %v234 = vunpack.c.l.b16 %v99
    %v235 = vunpack.c.h.b16 %v99
    %v236 = vunpack.c.l.b16 %v100
    %v237 = vunpack.c.h.b16 %v100
    %v238 = vunpack.c.l.b16 %v101
    %v239 = vunpack.c.h.b16 %v101
    %v240 = vunpack.c.l.b16 %v102
    %v241 = vunpack.c.h.b16 %v102
    %v242 = vunpack.c.l.b16 %v103
    %v243 = vunpack.c.h.b16 %v103
    %v244 = vunpack.c.l.b16 %v104
    %v245 = vunpack.c.h.b16 %v104
    %v246 = vunpack.c.l.b16 %v105
    %v247 = vunpack.c.h.b16 %v105
    %v248 = vpack.c.b16 %v188, %v184
    %v249 = vpack.c.b16 %v189, %v185
    %v250 = vpack.c.b16 %v190, %v186
    %v251 = vpack.c.b16 %v191, %v187
    %v252 = vpack.c.b16 %v196, %v192
    %v253 = vpack.c.b16 %v197, %v193
    %v254 = vpack.c.b16 %v198, %v194
    %v255 = vpack.c.b16 %v199, %v195
    %v256 = vpack.c.b16 %v204, %v200
    %v257 = vpack.c.b16 %v205, %v201
    %v258 = vpack.c.b16 %v206, %v202
    %v259 = vpack.c.b16 %v207, %v203
    %v260 = vpack.c.b16 %v212, %v208
    %v261 = vpack.c.b16 %v213, %v209
    %v262 = vpack.c.b16 %v214, %v210
    %v263 = vpack.c.b16 %v215, %v211
    %v264 = vpack.c.b16 %v220, %v216
    %v265 = vpack.c.b16 %v221, %v217
    %v266 = vpack.c.b16 %v222, %v218
    %v267 = vpack.c.b16 %v223, %v219
    %v268 = vpack.c.b16 %v228, %v224
    %v269 = vpack.c.b16 %v229, %v225
    %v270 = vpack.c.b16 %v230, %v226
    %v271 = vpack.c.b16 %v231, %v227
    %v272 = vpack.c.b16 %v236, %v232
    %v273 = vpack.c.b16 %v237, %v233
    %v274 = vpack.c.b16 %v238, %v234
    %v275 = vpack.c.b16 %v239, %v235
    %v276 = vpack.c.b16 %v244, %v240
    %v277 = vpack.c.b16 %v245, %v241
    %v278 = vpack.c.b16 %v246, %v242
    %v279 = vpack.c.b16 %v247, %v243
    %312 = vmatprep.subr.bf16.mxu0 %v277
    %313 = vmatpush1.bf16.msra.mxu0 %v276
    %314 = vmatprep.subr.bf16.mxu0 %v273
    %315 = vmatpush1.bf16.msra.mxu0 %v272
    %316 = vmatprep.subr.bf16.mxu0 %v269
    %317 = vmatpush1.bf16.msra.mxu0 %v268
    %318 = vmatprep.subr.bf16.mxu0 %v265
    %319 = vmatpush1.bf16.msra.mxu0 %v264
    %320 = vmatprep.subr.bf16.mxu0 %v261
    %321 = vmatpush1.bf16.msra.mxu0 %v260
    %322 = vmatprep.subr.bf16.mxu0 %v257
    %323 = vmatpush1.bf16.msra.mxu0 %v256
    %324 = vmatprep.subr.bf16.mxu0 %v253
    %325 = vmatpush1.bf16.msra.mxu0 %v252
    %326 = vmatprep.subr.bf16.mxu0 %v249
    %327 = vmatpush1.bf16.msra.mxu0 %v248
    %328 = vmatprep.subr.bf16.mxu0 0
    %329 = vmatpush2.bf16.msra.mxu0 0
    %330 = vmatprep.subr.bf16.mxu0 0
    %331 = vmatpush2.bf16.msra.mxu0 0
    %332 = vmatprep.subr.bf16.mxu0 0
    %333 = vmatpush2.bf16.msra.mxu0 0
    %334 = vmatprep.subr.bf16.mxu0 0
    %335 = vmatpush2.bf16.msra.mxu0 0
    %336 = vmatprep.subr.bf16.mxu0 0
    %337 = vmatpush2.bf16.msra.mxu0 0
    %338 = vmatprep.subr.bf16.mxu0 0
    %339 = vmatpush2.bf16.msra.mxu0 0
    %340 = vmatprep.subr.bf16.mxu0 0
    %341 = vmatpush2.bf16.msra.mxu0 0
    %342 = vmatprep.subr.bf16.mxu0 0
    %343 = vmatpush2.bf16.msra.mxu0 0
    %344 = vmatprep.mubr.bf16.mxu0 0
    %345 = vmatmul.mubr.bf16.gmra.mxu0 %v144
    %v346 = vpop.f32.mrf.mxu0
    %v347 = vadd.f32 %v111, %v346
    %v348 = vpop.f32.mrf.mxu0
    %v349 = vadd.f32 %v115, %v348
    %v350 = vpop.f32.mrf.mxu0
    %v351 = vadd.f32 %v111, %v350
    %v352 = vpop.f32.mrf.mxu0
    %v353 = vadd.f32 %v115, %v352
    %354 = vmatprep.mubr.bf16.mxu0 0
    %355 = vmatmul.mubr.bf16.gmra.mxu0 %v145
    %v356 = vpop.f32.mrf.mxu0
    %v357 = vadd.f32 %v111, %v356
    %v358 = vpop.f32.mrf.mxu0
    %v359 = vadd.f32 %v115, %v358
    %v360 = vpop.f32.mrf.mxu0
    %v361 = vadd.f32 %v111, %v360
    %v362 = vpop.f32.mrf.mxu0
    %v363 = vadd.f32 %v115, %v362
    %364 = vmatprep.mubr.bf16.mxu0 0
    %365 = vmatmul.mubr.bf16.gmra.mxu0 %v146
    %v366 = vpop.f32.mrf.mxu0
    %v367 = vadd.f32 %v111, %v366
    %v368 = vpop.f32.mrf.mxu0
    %v369 = vadd.f32 %v115, %v368
    %v370 = vpop.f32.mrf.mxu0
    %v371 = vadd.f32 %v111, %v370
    %v372 = vpop.f32.mrf.mxu0
    %v373 = vadd.f32 %v115, %v372
    %374 = vmatprep.mubr.bf16.mxu0 0
    %375 = vmatmul.mubr.bf16.gmra.mxu0 %v147
    %v376 = vpop.f32.mrf.mxu0
    %v377 = vadd.f32 %v111, %v376
    %v378 = vpop.f32.mrf.mxu0
    %v379 = vadd.f32 %v115, %v378
    %v380 = vpop.f32.mrf.mxu0
    %v381 = vadd.f32 %v111, %v380
    %v382 = vpop.f32.mrf.mxu0
    %v383 = vadd.f32 %v115, %v382
    %384 = vdwg.mxu0
    %385 = vmatprep.subr.bf16.mxu0 %v279
    %386 = vmatpush1.bf16.msra.mxu0 %v278
    %387 = vmatprep.subr.bf16.mxu0 %v275
    %388 = vmatpush1.bf16.msra.mxu0 %v274
    %389 = vmatprep.subr.bf16.mxu0 %v271
    %390 = vmatpush1.bf16.msra.mxu0 %v270
    %391 = vmatprep.subr.bf16.mxu0 %v267
    %392 = vmatpush1.bf16.msra.mxu0 %v266
    %393 = vmatprep.subr.bf16.mxu0 %v263
    %394 = vmatpush1.bf16.msra.mxu0 %v262
    %395 = vmatprep.subr.bf16.mxu0 %v259
    %396 = vmatpush1.bf16.msra.mxu0 %v258
    %397 = vmatprep.subr.bf16.mxu0 %v255
    %398 = vmatpush1.bf16.msra.mxu0 %v254
    %399 = vmatprep.subr.bf16.mxu0 %v251
    %400 = vmatpush1.bf16.msra.mxu0 %v250
    %401 = vmatprep.subr.bf16.mxu0 0
    %402 = vmatpush2.bf16.msra.mxu0 0
    %403 = vmatprep.subr.bf16.mxu0 0
    %404 = vmatpush2.bf16.msra.mxu0 0
    %405 = vmatprep.subr.bf16.mxu0 0
    %406 = vmatpush2.bf16.msra.mxu0 0
    %407 = vmatprep.subr.bf16.mxu0 0
    %408 = vmatpush2.bf16.msra.mxu0 0
    %409 = vmatprep.subr.bf16.mxu0 0
    %410 = vmatpush2.bf16.msra.mxu0 0
    %411 = vmatprep.subr.bf16.mxu0 0
    %412 = vmatpush2.bf16.msra.mxu0 0
    %413 = vmatprep.subr.bf16.mxu0 0
    %414 = vmatpush2.bf16.msra.mxu0 0
    %415 = vmatprep.subr.bf16.mxu0 0
    %416 = vmatpush2.bf16.msra.mxu0 0
    %417 = vmatprep.mubr.bf16.mxu0 0
    %418 = vmatmul.mubr.bf16.gmra.mxu0 %v144
    %v419 = vpop.f32.mrf.mxu0
    %v420 = vadd.f32 %v119, %v419
    %v421 = vpop.f32.mrf.mxu0
    %v422 = vadd.f32 %v123, %v421
    %v423 = vpop.f32.mrf.mxu0
    %v424 = vadd.f32 %v119, %v423
    %v425 = vpop.f32.mrf.mxu0
    %v426 = vadd.f32 %v123, %v425
    %427 = vmatprep.mubr.bf16.mxu0 0
    %428 = vmatmul.mubr.bf16.gmra.mxu0 %v145
    %v429 = vpop.f32.mrf.mxu0
    %v430 = vadd.f32 %v119, %v429
    %v431 = vpop.f32.mrf.mxu0
    %v432 = vadd.f32 %v123, %v431
    %v433 = vpop.f32.mrf.mxu0
    %v434 = vadd.f32 %v119, %v433
    %v435 = vpop.f32.mrf.mxu0
    %v436 = vadd.f32 %v123, %v435
    %437 = vmatprep.mubr.bf16.mxu0 0
    %438 = vmatmul.mubr.bf16.gmra.mxu0 %v146
    %v439 = vpop.f32.mrf.mxu0
    %v440 = vadd.f32 %v119, %v439
    %v441 = vpop.f32.mrf.mxu0
    %v442 = vadd.f32 %v123, %v441
    %v443 = vpop.f32.mrf.mxu0
    %v444 = vadd.f32 %v119, %v443
    %v445 = vpop.f32.mrf.mxu0
    %v446 = vadd.f32 %v123, %v445
    %447 = vmatprep.mubr.bf16.mxu0 0
    %448 = vmatmul.mubr.bf16.gmra.mxu0 %v147
    %v449 = vpop.f32.mrf.mxu0
    %v450 = vadd.f32 %v119, %v449
    %v451 = vpop.f32.mrf.mxu0
    %v452 = vadd.f32 %v123, %v451
    %v453 = vpop.f32.mrf.mxu0
    %v454 = vadd.f32 %v119, %v453
    %v455 = vpop.f32.mrf.mxu0
    %v456 = vadd.f32 %v123, %v455
    %457 = vdwg.mxu0
    %458 = vst [vmem:[#allocation2] sm:$0xff] %v347
    %459 = vst [vmem:[#allocation2 + $0x8] sm:$0xff] %v349
    %460 = vst [vmem:[#allocation2 + $0x10] sm:$0xff] %v420
    %461 = vst [vmem:[#allocation2 + $0x18] sm:$0xff] %v422
    %462 = vst [vmem:[#allocation2 + $0x20] sm:$0xff] %v351
    %463 = vst [vmem:[#allocation2 + $0x28] sm:$0xff] %v353
    %464 = vst [vmem:[#allocation2 + $0x30] sm:$0xff] %v424
    %465 = vst [vmem:[#allocation2 + $0x38] sm:$0xff] %v426
    %466 = vst [vmem:[#allocation2 + $0x40] sm:$0xff] %v357
    %467 = vst [vmem:[#allocation2 + $0x48] sm:$0xff] %v359
    %468 = vst [vmem:[#allocation2 + $0x50] sm:$0xff] %v430
    %469 = vst [vmem:[#allocation2 + $0x58] sm:$0xff] %v432
    %470 = vst [vmem:[#allocation2 + $0x60] sm:$0xff] %v361
    %471 = vst [vmem:[#allocation2 + $0x68] sm:$0xff] %v363
    %472 = vst [vmem:[#allocation2 + $0x70] sm:$0xff] %v434
    %473 = vst [vmem:[#allocation2 + $0x78] sm:$0xff] %v436
    %474 = vst [vmem:[#allocation2 + $0x80] sm:$0xff] %v367
    %475 = vst [vmem:[#allocation2 + $0x88] sm:$0xff] %v369
    %476 = vst [vmem:[#allocation2 + $0x90] sm:$0xff] %v440
    %477 = vst [vmem:[#allocation2 + $0x98] sm:$0xff] %v442
    %478 = vst [vmem:[#allocation2 + $0xa0] sm:$0xff] %v371
    %479 = vst [vmem:[#allocation2 + $0xa8] sm:$0xff] %v373
    %480 = vst [vmem:[#allocation2 + $0xb0] sm:$0xff] %v444
    %481 = vst [vmem:[#allocation2 + $0xb8] sm:$0xff] %v446
    %482 = vst [vmem:[#allocation2 + $0xc0] sm:$0xff] %v377
    %483 = vst [vmem:[#allocation2 + $0xc8] sm:$0xff] %v379
    %484 = vst [vmem:[#allocation2 + $0xd0] sm:$0xff] %v450
    %485 = vst [vmem:[#allocation2 + $0xd8] sm:$0xff] %v452
    %486 = vst [vmem:[#allocation2 + $0xe0] sm:$0xff] %v381
    %487 = vst [vmem:[#allocation2 + $0xe8] sm:$0xff] %v383
    %488 = vst [vmem:[#allocation2 + $0xf0] sm:$0xff] %v454
    %489 = vst [vmem:[#allocation2 + $0xf8] sm:$0xff] %v456
    %v490 = vld [vmem:[#allocation3] sm:$0xff]
    %v491 = vld [vmem:[#allocation4] sm:$0xff]
    %v492 = vld [vmem:[#allocation2] sm:$0xff]
    %v493 = vld [vmem:[#allocation2 + $0x8] sm:$0xff]
    %v494 = vld [vmem:[#allocation2 + $0x10] sm:$0xff]
    %v495 = vld [vmem:[#allocation2 + $0x18] sm:$0xff]
    %v496 = vpack.c.bf16 %v490, %v490
    %v497 = vld [vmem:[#allocation10] sm:$0xff]
    %v498 = vld [vmem:[#allocation10 + $0x8] sm:$0xff]
    %v499 = vld [vmem:[#allocation10 + $0x10] sm:$0xff]
    %v500 = vld [vmem:[#allocation10 + $0x18] sm:$0xff]
    %v501 = vld [vmem:[#allocation10 + $0x20] sm:$0xff]
    %v502 = vld [vmem:[#allocation10 + $0x28] sm:$0xff]
    %v503 = vld [vmem:[#allocation10 + $0x30] sm:$0xff]
    %v504 = vld [vmem:[#allocation10 + $0x38] sm:$0xff]
    %v505 = vld [vmem:[#allocation10 + $0x40] sm:$0xff]
    %v506 = vld [vmem:[#allocation10 + $0x48] sm:$0xff]
    %v507 = vld [vmem:[#allocation10 + $0x50] sm:$0xff]
    %v508 = vld [vmem:[#allocation10 + $0x58] sm:$0xff]
    %v509 = vld [vmem:[#allocation10 + $0x60] sm:$0xff]
    %v510 = vld [vmem:[#allocation10 + $0x68] sm:$0xff]
    %v511 = vld [vmem:[#allocation10 + $0x70] sm:$0xff]
    %v512 = vld [vmem:[#allocation10 + $0x78] sm:$0xff]
    %v513 = vld [vmem:[#allocation10 + $0x80] sm:$0xff]
    %v514 = vld [vmem:[#allocation10 + $0x88] sm:$0xff]
    %v515 = vld [vmem:[#allocation10 + $0x90] sm:$0xff]
    %v516 = vld [vmem:[#allocation10 + $0x98] sm:$0xff]
    %v517 = vld [vmem:[#allocation10 + $0xa0] sm:$0xff]
    %v518 = vld [vmem:[#allocation10 + $0xa8] sm:$0xff]
    %v519 = vld [vmem:[#allocation10 + $0xb0] sm:$0xff]
    %v520 = vld [vmem:[#allocation10 + $0xb8] sm:$0xff]
    %v521 = vld [vmem:[#allocation10 + $0xc0] sm:$0xff]
    %v522 = vld [vmem:[#allocation10 + $0xc8] sm:$0xff]
    %v523 = vld [vmem:[#allocation10 + $0xd0] sm:$0xff]
    %v524 = vld [vmem:[#allocation10 + $0xd8] sm:$0xff]
    %v525 = vld [vmem:[#allocation10 + $0xe0] sm:$0xff]
    %v526 = vld [vmem:[#allocation10 + $0xe8] sm:$0xff]
    %v527 = vld [vmem:[#allocation10 + $0xf0] sm:$0xff]
    %v528 = vld [vmem:[#allocation10 + $0xf8] sm:$0xff]
    %v561 = vunpack.c.l.b16 %v497
    %v562 = vunpack.c.h.b16 %v497
    %v563 = vunpack.c.l.b16 %v498
    %v564 = vunpack.c.h.b16 %v498
    %v565 = vunpack.c.l.b16 %v499
    %v566 = vunpack.c.h.b16 %v499
    %v567 = vunpack.c.l.b16 %v500
    %v568 = vunpack.c.h.b16 %v500
    %v569 = vunpack.c.l.b16 %v501
    %v570 = vunpack.c.h.b16 %v501
    %v571 = vunpack.c.l.b16 %v502
    %v572 = vunpack.c.h.b16 %v502
    %v573 = vunpack.c.l.b16 %v503
    %v574 = vunpack.c.h.b16 %v503
    %v575 = vunpack.c.l.b16 %v504
    %v576 = vunpack.c.h.b16 %v504
    %v577 = vunpack.c.l.b16 %v505
    %v578 = vunpack.c.h.b16 %v505
    %v579 = vunpack.c.l.b16 %v506
    %v580 = vunpack.c.h.b16 %v506
    %v581 = vunpack.c.l.b16 %v507
    %v582 = vunpack.c.h.b16 %v507
    %v583 = vunpack.c.l.b16 %v508
    %v584 = vunpack.c.h.b16 %v508
    %v585 = vunpack.c.l.b16 %v509
    %v586 = vunpack.c.h.b16 %v509
    %v587 = vunpack.c.l.b16 %v510
    %v588 = vunpack.c.h.b16 %v510
    %v589 = vunpack.c.l.b16 %v511
    %v590 = vunpack.c.h.b16 %v511
    %v591 = vunpack.c.l.b16 %v512
    %v592 = vunpack.c.h.b16 %v512
    %v593 = vunpack.c.l.b16 %v513
    %v594 = vunpack.c.h.b16 %v513
    %v595 = vunpack.c.l.b16 %v514
    %v596 = vunpack.c.h.b16 %v514
    %v597 = vunpack.c.l.b16 %v515
    %v598 = vunpack.c.h.b16 %v515
    %v599 = vunpack.c.l.b16 %v516
    %v600 = vunpack.c.h.b16 %v516
    %v601 = vunpack.c.l.b16 %v517
    %v602 = vunpack.c.h.b16 %v517
    %v603 = vunpack.c.l.b16 %v518
    %v604 = vunpack.c.h.b16 %v518
    %v605 = vunpack.c.l.b16 %v519
    %v606 = vunpack.c.h.b16 %v519
    %v607 = vunpack.c.l.b16 %v520
    %v608 = vunpack.c.h.b16 %v520
    %v609 = vunpack.c.l.b16 %v521
    %v610 = vunpack.c.h.b16 %v521
    %v611 = vunpack.c.l.b16 %v522
    %v612 = vunpack.c.h.b16 %v522
    %v613 = vunpack.c.l.b16 %v523
    %v614 = vunpack.c.h.b16 %v523
    %v615 = vunpack.c.l.b16 %v524
    %v616 = vunpack.c.h.b16 %v524
    %v617 = vunpack.c.l.b16 %v525
    %v618 = vunpack.c.h.b16 %v525
    %v619 = vunpack.c.l.b16 %v526
    %v620 = vunpack.c.h.b16 %v526
    %v621 = vunpack.c.l.b16 %v527
    %v622 = vunpack.c.h.b16 %v527
    %v623 = vunpack.c.l.b16 %v528
    %v624 = vunpack.c.h.b16 %v528
    %v625 = vpack.c.b16 %v565, %v561
    %v626 = vpack.c.b16 %v566, %v562
    %v627 = vpack.c.b16 %v567, %v563
    %v628 = vpack.c.b16 %v568, %v564
    %v629 = vpack.c.b16 %v573, %v569
    %v630 = vpack.c.b16 %v574, %v570
    %v631 = vpack.c.b16 %v575, %v571
    %v632 = vpack.c.b16 %v576, %v572
    %v633 = vpack.c.b16 %v581, %v577
    %v634 = vpack.c.b16 %v582, %v578
    %v635 = vpack.c.b16 %v583, %v579
    %v636 = vpack.c.b16 %v584, %v580
    %v637 = vpack.c.b16 %v589, %v585
    %v638 = vpack.c.b16 %v590, %v586
    %v639 = vpack.c.b16 %v591, %v587
    %v640 = vpack.c.b16 %v592, %v588
    %v641 = vpack.c.b16 %v597, %v593
    %v642 = vpack.c.b16 %v598, %v594
    %v643 = vpack.c.b16 %v599, %v595
    %v644 = vpack.c.b16 %v600, %v596
    %v645 = vpack.c.b16 %v605, %v601
    %v646 = vpack.c.b16 %v606, %v602
    %v647 = vpack.c.b16 %v607, %v603
    %v648 = vpack.c.b16 %v608, %v604
    %v649 = vpack.c.b16 %v613, %v609
    %v650 = vpack.c.b16 %v614, %v610
    %v651 = vpack.c.b16 %v615, %v611
    %v652 = vpack.c.b16 %v616, %v612
    %v653 = vpack.c.b16 %v621, %v617
    %v654 = vpack.c.b16 %v622, %v618
    %v655 = vpack.c.b16 %v623, %v619
    %v656 = vpack.c.b16 %v624, %v620
    %689 = vmatprep.subr.bf16.mxu0 %v654
    %690 = vmatpush1.bf16.msra.mxu0 %v653
    %691 = vmatprep.subr.bf16.mxu0 %v650
    %692 = vmatpush1.bf16.msra.mxu0 %v649
    %693 = vmatprep.subr.bf16.mxu0 %v646
    %694 = vmatpush1.bf16.msra.mxu0 %v645
    %695 = vmatprep.subr.bf16.mxu0 %v642
    %696 = vmatpush1.bf16.msra.mxu0 %v641
    %697 = vmatprep.subr.bf16.mxu0 %v638
    %698 = vmatpush1.bf16.msra.mxu0 %v637
    %699 = vmatprep.subr.bf16.mxu0 %v634
    %700 = vmatpush1.bf16.msra.mxu0 %v633
    %701 = vmatprep.subr.bf16.mxu0 %v630
    %702 = vmatpush1.bf16.msra.mxu0 %v629
    %703 = vmatprep.subr.bf16.mxu0 %v626
    %704 = vmatpush1.bf16.msra.mxu0 %v625
    %705 = vmatprep.subr.bf16.mxu0 0
    %706 = vmatpush2.bf16.msra.mxu0 0
    %707 = vmatprep.subr.bf16.mxu0 0
    %708 = vmatpush2.bf16.msra.mxu0 0
    %709 = vmatprep.subr.bf16.mxu0 0
    %710 = vmatpush2.bf16.msra.mxu0 0
    %711 = vmatprep.subr.bf16.mxu0 0
    %712 = vmatpush2.bf16.msra.mxu0 0
    %713 = vmatprep.subr.bf16.mxu0 0
    %714 = vmatpush2.bf16.msra.mxu0 0
    %715 = vmatprep.subr.bf16.mxu0 0
    %716 = vmatpush2.bf16.msra.mxu0 0
    %717 = vmatprep.subr.bf16.mxu0 0
    %718 = vmatpush2.bf16.msra.mxu0 0
    %719 = vmatprep.subr.bf16.mxu0 0
    %720 = vmatpush2.bf16.msra.mxu0 0
    %721 = vmatprep.mubr.bf16.mxu0 0
    %722 = vmatmul.mubr.bf16.gmra.mxu0 %v496
    %v723 = vpop.f32.mrf.mxu0
    %v724 = vadd.f32 0.0, %v723
    %v725 = vpop.f32.mrf.mxu0
    %v726 = vadd.f32 0.0, %v725
    %v727 = vpop.f32.mrf.mxu0
    %v728 = vpop.f32.mrf.mxu0
    %729 = vdwg.mxu0
    %730 = vmatprep.subr.bf16.mxu0 %v656
    %731 = vmatpush1.bf16.msra.mxu0 %v655
    %732 = vmatprep.subr.bf16.mxu0 %v652
    %733 = vmatpush1.bf16.msra.mxu0 %v651
    %734 = vmatprep.subr.bf16.mxu0 %v648
    %735 = vmatpush1.bf16.msra.mxu0 %v647
    %736 = vmatprep.subr.bf16.mxu0 %v644
    %737 = vmatpush1.bf16.msra.mxu0 %v643
    %738 = vmatprep.subr.bf16.mxu0 %v640
    %739 = vmatpush1.bf16.msra.mxu0 %v639
    %740 = vmatprep.subr.bf16.mxu0 %v636
    %741 = vmatpush1.bf16.msra.mxu0 %v635
    %742 = vmatprep.subr.bf16.mxu0 %v632
    %743 = vmatpush1.bf16.msra.mxu0 %v631
    %744 = vmatprep.subr.bf16.mxu0 %v628
    %745 = vmatpush1.bf16.msra.mxu0 %v627
    %746 = vmatprep.subr.bf16.mxu0 0
    %747 = vmatpush2.bf16.msra.mxu0 0
    %748 = vmatprep.subr.bf16.mxu0 0
    %749 = vmatpush2.bf16.msra.mxu0 0
    %750 = vmatprep.subr.bf16.mxu0 0
    %751 = vmatpush2.bf16.msra.mxu0 0
    %752 = vmatprep.subr.bf16.mxu0 0
    %753 = vmatpush2.bf16.msra.mxu0 0
    %754 = vmatprep.subr.bf16.mxu0 0
    %755 = vmatpush2.bf16.msra.mxu0 0
    %756 = vmatprep.subr.bf16.mxu0 0
    %757 = vmatpush2.bf16.msra.mxu0 0
    %758 = vmatprep.subr.bf16.mxu0 0
    %759 = vmatpush2.bf16.msra.mxu0 0
    %760 = vmatprep.subr.bf16.mxu0 0
    %761 = vmatpush2.bf16.msra.mxu0 0
    %762 = vmatprep.mubr.bf16.mxu0 0
    %763 = vmatmul.mubr.bf16.gmra.mxu0 %v496
    %v764 = vpop.f32.mrf.mxu0
    %v765 = vadd.f32 0.0, %v764
    %v766 = vpop.f32.mrf.mxu0
    %v767 = vadd.f32 0.0, %v766
    %v768 = vpop.f32.mrf.mxu0
    %v769 = vpop.f32.mrf.mxu0
    %770 = vdwg.mxu0
    %v771 = vadd.f32 %v492, %v724
    %v772 = vadd.f32 %v493, %v726
    %v773 = vadd.f32 %v494, %v765
    %v774 = vadd.f32 %v495, %v767
    %v775 = vxor.u32 %v771, 2147483648
    %v776 = vmul.f32 %v775, 1.442695
    %v777 = vpow.pop %v776
    %v778 = vadd.f32 %v777, 1.0
    %v779 = vrcp.pop %v778
    %v780 = vmul.f32 1.0, %v779
    %v781 = vxor.u32 %v772, 2147483648
    %v782 = vmul.f32 %v781, 1.442695
    %v783 = vpow.pop %v782
    %v784 = vadd.f32 %v783, 1.0
    %v785 = vrcp.pop %v784
    %v786 = vmul.f32 1.0, %v785
    %v787 = vtanh.pop %v773
    %v788 = vxor.u32 %v774, 2147483648
    %v789 = vmul.f32 %v788, 1.442695
    %v790 = vpow.pop %v789
    %v791 = vadd.f32 %v790, 1.0
    %v792 = vrcp.pop %v791
    %v793 = vmul.f32 1.0, %v792
    %v794 = vmul.f32 %v786, %v491
    %v795 = vmul.f32 %v780, %v787
    %v796 = vadd.f32 %v794, %v795
    %v797 = vtanh.pop %v796
    %v798 = vmul.f32 %v793, %v797
    %s799 = scalar_lea.vmem [#allocation2], 32
    %v800 = vld [vmem:[%s799] sm:$0xff]
    %v801 = vld [vmem:[%s799 + $0x8] sm:$0xff]
    %v802 = vld [vmem:[%s799 + $0x10] sm:$0xff]
    %v803 = vld [vmem:[%s799 + $0x18] sm:$0xff]
    %v804 = vpack.c.bf16 %v798, %v798
    %805 = vmatprep.subr.bf16.mxu0 %v654
    %806 = vmatpush1.bf16.msra.mxu0 %v653
    %807 = vmatprep.subr.bf16.mxu0 %v650
    %808 = vmatpush1.bf16.msra.mxu0 %v649
    %809 = vmatprep.subr.bf16.mxu0 %v646
    %810 = vmatpush1.bf16.msra.mxu0 %v645
    %811 = vmatprep.subr.bf16.mxu0 %v642
    %812 = vmatpush1.bf16.msra.mxu0 %v641
    %813 = vmatprep.subr.bf16.mxu0 %v638
    %814 = vmatpush1.bf16.msra.mxu0 %v637
    %815 = vmatprep.subr.bf16.mxu0 %v634
    %816 = vmatpush1.bf16.msra.mxu0 %v633
    %817 = vmatprep.subr.bf16.mxu0 %v630
    %818 = vmatpush1.bf16.msra.mxu0 %v629
    %819 = vmatprep.subr.bf16.mxu0 %v626
    %820 = vmatpush1.bf16.msra.mxu0 %v625
    %821 = vmatprep.subr.bf16.mxu0 0
    %822 = vmatpush2.bf16.msra.mxu0 0
    %823 = vmatprep.subr.bf16.mxu0 0
    %824 = vmatpush2.bf16.msra.mxu0 0
    %825 = vmatprep.subr.bf16.mxu0 0
    %826 = vmatpush2.bf16.msra.mxu0 0
    %827 = vmatprep.subr.bf16.mxu0 0
    %828 = vmatpush2.bf16.msra.mxu0 0
    %829 = vmatprep.subr.bf16.mxu0 0
    %830 = vmatpush2.bf16.msra.mxu0 0
    %831 = vmatprep.subr.bf16.mxu0 0
    %832 = vmatpush2.bf16.msra.mxu0 0
    %833 = vmatprep.subr.bf16.mxu0 0
    %834 = vmatpush2.bf16.msra.mxu0 0
    %835 = vmatprep.subr.bf16.mxu0 0
    %836 = vmatpush2.bf16.msra.mxu0 0
    %837 = vmatprep.mubr.bf16.mxu0 0
    %838 = vmatmul.mubr.bf16.gmra.mxu0 %v804
    %v839 = vpop.f32.mrf.mxu0
    %v840 = vadd.f32 0.0, %v839
    %v841 = vpop.f32.mrf.mxu0
    %v842 = vadd.f32 0.0, %v841
    %v843 = vpop.f32.mrf.mxu0
    %v844 = vpop.f32.mrf.mxu0
    %845 = vdwg.mxu0
    %846 = vmatprep.subr.bf16.mxu0 %v656
    %847 = vmatpush1.bf16.msra.mxu0 %v655
    %848 = vmatprep.subr.bf16.mxu0 %v652
    %849 = vmatpush1.bf16.msra.mxu0 %v651
    %850 = vmatprep.subr.bf16.mxu0 %v648
    %851 = vmatpush1.bf16.msra.mxu0 %v647
    %852 = vmatprep.subr.bf16.mxu0 %v644
    %853 = vmatpush1.bf16.msra.mxu0 %v643
    %854 = vmatprep.subr.bf16.mxu0 %v640
    %855 = vmatpush1.bf16.msra.mxu0 %v639
    %856 = vmatprep.subr.bf16.mxu0 %v636
    %857 = vmatpush1.bf16.msra.mxu0 %v635
    %858 = vmatprep.subr.bf16.mxu0 %v632
    %859 = vmatpush1.bf16.msra.mxu0 %v631
    %860 = vmatprep.subr.bf16.mxu0 %v628
    %861 = vmatpush1.bf16.msra.mxu0 %v627
    %862 = vmatprep.subr.bf16.mxu0 0
    %863 = vmatpush2.bf16.msra.mxu0 0
    %864 = vmatprep.subr.bf16.mxu0 0
    %865 = vmatpush2.bf16.msra.mxu0 0
    %866 = vmatprep.subr.bf16.mxu0 0
    %867 = vmatpush2.bf16.msra.mxu0 0
    %868 = vmatprep.subr.bf16.mxu0 0
    %869 = vmatpush2.bf16.msra.mxu0 0
    %870 = vmatprep.subr.bf16.mxu0 0
    %871 = vmatpush2.bf16.msra.mxu0 0
    %872 = vmatprep.subr.bf16.mxu0 0
    %873 = vmatpush2.bf16.msra.mxu0 0
    %874 = vmatprep.subr.bf16.mxu0 0
    %875 = vmatpush2.bf16.msra.mxu0 0
    %876 = vmatprep.subr.bf16.mxu0 0
    %877 = vmatpush2.bf16.msra.mxu0 0
    %878 = vmatprep.mubr.bf16.mxu0 0
    %879 = vmatmul.mubr.bf16.gmra.mxu0 %v804
    %v880 = vpop.f32.mrf.mxu0
    %v881 = vadd.f32 0.0, %v880
    %v882 = vpop.f32.mrf.mxu0
    %v883 = vadd.f32 0.0, %v882
    %v884 = vpop.f32.mrf.mxu0
    %v885 = vpop.f32.mrf.mxu0
    %886 = vdwg.mxu0
    %v887 = vadd.f32 %v800, %v840
    %v888 = vadd.f32 %v801, %v842
    %v889 = vadd.f32 %v802, %v881
    %v890 = vadd.f32 %v803, %v883
    %v891 = vxor.u32 %v887, 2147483648
    %v892 = vmul.f32 %v891, 1.442695
    %v893 = vpow.pop %v892
    %v894 = vadd.f32 %v893, 1.0
    %v895 = vrcp.pop %v894
    %v896 = vmul.f32 1.0, %v895
    %v897 = vxor.u32 %v888, 2147483648
    %v898 = vmul.f32 %v897, 1.442695
    %v899 = vpow.pop %v898
    %v900 = vadd.f32 %v899, 1.0
    %v901 = vrcp.pop %v900
    %v902 = vmul.f32 1.0, %v901
    %v903 = vtanh.pop %v889
    %v904 = vxor.u32 %v890, 2147483648
    %v905 = vmul.f32 %v904, 1.442695
    %v906 = vpow.pop %v905
    %v907 = vadd.f32 %v906, 1.0
    %v908 = vrcp.pop %v907
    %v909 = vmul.f32 1.0, %v908
    %v910 = vmul.f32 %v902, %v796
    %v911 = vmul.f32 %v896, %v903
    %v912 = vadd.f32 %v910, %v911
    %v913 = vtanh.pop %v912
    %v914 = vmul.f32 %v909, %v913
    %s915 = scalar_lea.vmem [#allocation2], 64
    %v916 = vld [vmem:[%s915] sm:$0xff]
    %v917 = vld [vmem:[%s915 + $0x8] sm:$0xff]
    %v918 = vld [vmem:[%s915 + $0x10] sm:$0xff]
    %v919 = vld [vmem:[%s915 + $0x18] sm:$0xff]
    %v920 = vpack.c.bf16 %v914, %v914
    %921 = vmatprep.subr.bf16.mxu0 %v654
    %922 = vmatpush1.bf16.msra.mxu0 %v653
    %923 = vmatprep.subr.bf16.mxu0 %v650
    %924 = vmatpush1.bf16.msra.mxu0 %v649
    %925 = vmatprep.subr.bf16.mxu0 %v646
    %926 = vmatpush1.bf16.msra.mxu0 %v645
    %927 = vmatprep.subr.bf16.mxu0 %v642
    %928 = vmatpush1.bf16.msra.mxu0 %v641
    %929 = vmatprep.subr.bf16.mxu0 %v638
    %930 = vmatpush1.bf16.msra.mxu0 %v637
    %931 = vmatprep.subr.bf16.mxu0 %v634
    %932 = vmatpush1.bf16.msra.mxu0 %v633
    %933 = vmatprep.subr.bf16.mxu0 %v630
    %934 = vmatpush1.bf16.msra.mxu0 %v629
    %935 = vmatprep.subr.bf16.mxu0 %v626
    %936 = vmatpush1.bf16.msra.mxu0 %v625
    %937 = vmatprep.subr.bf16.mxu0 0
    %938 = vmatpush2.bf16.msra.mxu0 0
    %939 = vmatprep.subr.bf16.mxu0 0
    %940 = vmatpush2.bf16.msra.mxu0 0
    %941 = vmatprep.subr.bf16.mxu0 0
    %942 = vmatpush2.bf16.msra.mxu0 0
    %943 = vmatprep.subr.bf16.mxu0 0
    %944 = vmatpush2.bf16.msra.mxu0 0
    %945 = vmatprep.subr.bf16.mxu0 0
    %946 = vmatpush2.bf16.msra.mxu0 0
    %947 = vmatprep.subr.bf16.mxu0 0
    %948 = vmatpush2.bf16.msra.mxu0 0
    %949 = vmatprep.subr.bf16.mxu0 0
    %950 = vmatpush2.bf16.msra.mxu0 0
    %951 = vmatprep.subr.bf16.mxu0 0
    %952 = vmatpush2.bf16.msra.mxu0 0
    %953 = vmatprep.mubr.bf16.mxu0 0
    %954 = vmatmul.mubr.bf16.gmra.mxu0 %v920
    %v955 = vpop.f32.mrf.mxu0
    %v956 = vadd.f32 0.0, %v955
    %v957 = vpop.f32.mrf.mxu0
    %v958 = vadd.f32 0.0, %v957
    %v959 = vpop.f32.mrf.mxu0
    %v960 = vpop.f32.mrf.mxu0
    %961 = vdwg.mxu0
    %962 = vmatprep.subr.bf16.mxu0 %v656
    %963 = vmatpush1.bf16.msra.mxu0 %v655
    %964 = vmatprep.subr.bf16.mxu0 %v652
    %965 = vmatpush1.bf16.msra.mxu0 %v651
    %966 = vmatprep.subr.bf16.mxu0 %v648
    %967 = vmatpush1.bf16.msra.mxu0 %v647
    %968 = vmatprep.subr.bf16.mxu0 %v644
    %969 = vmatpush1.bf16.msra.mxu0 %v643
    %970 = vmatprep.subr.bf16.mxu0 %v640
    %971 = vmatpush1.bf16.msra.mxu0 %v639
    %972 = vmatprep.subr.bf16.mxu0 %v636
    %973 = vmatpush1.bf16.msra.mxu0 %v635
    %974 = vmatprep.subr.bf16.mxu0 %v632
    %975 = vmatpush1.bf16.msra.mxu0 %v631
    %976 = vmatprep.subr.bf16.mxu0 %v628
    %977 = vmatpush1.bf16.msra.mxu0 %v627
    %978 = vmatprep.subr.bf16.mxu0 0
    %979 = vmatpush2.bf16.msra.mxu0 0
    %980 = vmatprep.subr.bf16.mxu0 0
    %981 = vmatpush2.bf16.msra.mxu0 0
    %982 = vmatprep.subr.bf16.mxu0 0
    %983 = vmatpush2.bf16.msra.mxu0 0
    %984 = vmatprep.subr.bf16.mxu0 0
    %985 = vmatpush2.bf16.msra.mxu0 0
    %986 = vmatprep.subr.bf16.mxu0 0
    %987 = vmatpush2.bf16.msra.mxu0 0
    %988 = vmatprep.subr.bf16.mxu0 0
    %989 = vmatpush2.bf16.msra.mxu0 0
    %990 = vmatprep.subr.bf16.mxu0 0
    %991 = vmatpush2.bf16.msra.mxu0 0
    %992 = vmatprep.subr.bf16.mxu0 0
    %993 = vmatpush2.bf16.msra.mxu0 0
    %994 = vmatprep.mubr.bf16.mxu0 0
    %995 = vmatmul.mubr.bf16.gmra.mxu0 %v920
    %v996 = vpop.f32.mrf.mxu0
    %v997 = vadd.f32 0.0, %v996
    %v998 = vpop.f32.mrf.mxu0
    %v999 = vadd.f32 0.0, %v998
    %v1000 = vpop.f32.mrf.mxu0
    %v1001 = vpop.f32.mrf.mxu0
    %1002 = vdwg.mxu0
    %v1003 = vadd.f32 %v916, %v956
    %v1004 = vadd.f32 %v917, %v958
    %v1005 = vadd.f32 %v918, %v997
    %v1006 = vadd.f32 %v919, %v999
    %v1007 = vxor.u32 %v1003, 2147483648
    %v1008 = vmul.f32 %v1007, 1.442695
    %v1009 = vpow.pop %v1008
    %v1010 = vadd.f32 %v1009, 1.0
    %v1011 = vrcp.pop %v1010
    %v1012 = vmul.f32 1.0, %v1011
    %v1013 = vxor.u32 %v1004, 2147483648
    %v1014 = vmul.f32 %v1013, 1.442695
    %v1015 = vpow.pop %v1014
    %v1016 = vadd.f32 %v1015, 1.0
    %v1017 = vrcp.pop %v1016
    %v1018 = vmul.f32 1.0, %v1017
    %v1019 = vtanh.pop %v1005
    %v1020 = vxor.u32 %v1006, 2147483648
    %v1021 = vmul.f32 %v1020, 1.442695
    %v1022 = vpow.pop %v1021
    %v1023 = vadd.f32 %v1022, 1.0
    %v1024 = vrcp.pop %v1023
    %v1025 = vmul.f32 1.0, %v1024
    %v1026 = vmul.f32 %v1018, %v912
    %v1027 = vmul.f32 %v1012, %v1019
    %v1028 = vadd.f32 %v1026, %v1027
    %v1029 = vtanh.pop %v1028
    %v1030 = vmul.f32 %v1025, %v1029
    %s1031 = scalar_lea.vmem [#allocation2], 96
    %v1032 = vld [vmem:[%s1031] sm:$0xff]
    %v1033 = vld [vmem:[%s1031 + $0x8] sm:$0xff]
    %v1034 = vld [vmem:[%s1031 + $0x10] sm:$0xff]
    %v1035 = vld [vmem:[%s1031 + $0x18] sm:$0xff]
    %v1036 = vpack.c.bf16 %v1030, %v1030
    %1037 = vmatprep.subr.bf16.mxu0 %v654
    %1038 = vmatpush1.bf16.msra.mxu0 %v653
    %1039 = vmatprep.subr.bf16.mxu0 %v650
    %1040 = vmatpush1.bf16.msra.mxu0 %v649
    %1041 = vmatprep.subr.bf16.mxu0 %v646
    %1042 = vmatpush1.bf16.msra.mxu0 %v645
    %1043 = vmatprep.subr.bf16.mxu0 %v642
    %1044 = vmatpush1.bf16.msra.mxu0 %v641
    %1045 = vmatprep.subr.bf16.mxu0 %v638
    %1046 = vmatpush1.bf16.msra.mxu0 %v637
    %1047 = vmatprep.subr.bf16.mxu0 %v634
    %1048 = vmatpush1.bf16.msra.mxu0 %v633
    %1049 = vmatprep.subr.bf16.mxu0 %v630
    %1050 = vmatpush1.bf16.msra.mxu0 %v629
    %1051 = vmatprep.subr.bf16.mxu0 %v626
    %1052 = vmatpush1.bf16.msra.mxu0 %v625
    %1053 = vmatprep.subr.bf16.mxu0 0
    %1054 = vmatpush2.bf16.msra.mxu0 0
    %1055 = vmatprep.subr.bf16.mxu0 0
    %1056 = vmatpush2.bf16.msra.mxu0 0
    %1057 = vmatprep.subr.bf16.mxu0 0
    %1058 = vmatpush2.bf16.msra.mxu0 0
    %1059 = vmatprep.subr.bf16.mxu0 0
    %1060 = vmatpush2.bf16.msra.mxu0 0
    %1061 = vmatprep.subr.bf16.mxu0 0
    %1062 = vmatpush2.bf16.msra.mxu0 0
    %1063 = vmatprep.subr.bf16.mxu0 0
    %1064 = vmatpush2.bf16.msra.mxu0 0
    %1065 = vmatprep.subr.bf16.mxu0 0
    %1066 = vmatpush2.bf16.msra.mxu0 0
    %1067 = vmatprep.subr.bf16.mxu0 0
    %1068 = vmatpush2.bf16.msra.mxu0 0
    %1069 = vmatprep.mubr.bf16.mxu0 0
    %1070 = vmatmul.mubr.bf16.gmra.mxu0 %v1036
    %v1071 = vpop.f32.mrf.mxu0
    %v1072 = vadd.f32 0.0, %v1071
    %v1073 = vpop.f32.mrf.mxu0
    %v1074 = vadd.f32 0.0, %v1073
    %v1075 = vpop.f32.mrf.mxu0
    %v1076 = vpop.f32.mrf.mxu0
    %1077 = vdwg.mxu0
    %1078 = vmatprep.subr.bf16.mxu0 %v656
    %1079 = vmatpush1.bf16.msra.mxu0 %v655
    %1080 = vmatprep.subr.bf16.mxu0 %v652
    %1081 = vmatpush1.bf16.msra.mxu0 %v651
    %1082 = vmatprep.subr.bf16.mxu0 %v648
    %1083 = vmatpush1.bf16.msra.mxu0 %v647
    %1084 = vmatprep.subr.bf16.mxu0 %v644
    %1085 = vmatpush1.bf16.msra.mxu0 %v643
    %1086 = vmatprep.subr.bf16.mxu0 %v640
    %1087 = vmatpush1.bf16.msra.mxu0 %v639
    %1088 = vmatprep.subr.bf16.mxu0 %v636
    %1089 = vmatpush1.bf16.msra.mxu0 %v635
    %1090 = vmatprep.subr.bf16.mxu0 %v632
    %1091 = vmatpush1.bf16.msra.mxu0 %v631
    %1092 = vmatprep.subr.bf16.mxu0 %v628
    %1093 = vmatpush1.bf16.msra.mxu0 %v627
    %1094 = vmatprep.subr.bf16.mxu0 0
    %1095 = vmatpush2.bf16.msra.mxu0 0
    %1096 = vmatprep.subr.bf16.mxu0 0
    %1097 = vmatpush2.bf16.msra.mxu0 0
    %1098 = vmatprep.subr.bf16.mxu0 0
    %1099 = vmatpush2.bf16.msra.mxu0 0
    %1100 = vmatprep.subr.bf16.mxu0 0
    %1101 = vmatpush2.bf16.msra.mxu0 0
    %1102 = vmatprep.subr.bf16.mxu0 0
    %1103 = vmatpush2.bf16.msra.mxu0 0
    %1104 = vmatprep.subr.bf16.mxu0 0
    %1105 = vmatpush2.bf16.msra.mxu0 0
    %1106 = vmatprep.subr.bf16.mxu0 0
    %1107 = vmatpush2.bf16.msra.mxu0 0
    %1108 = vmatprep.subr.bf16.mxu0 0
    %1109 = vmatpush2.bf16.msra.mxu0 0
    %1110 = vmatprep.mubr.bf16.mxu0 0
    %1111 = vmatmul.mubr.bf16.gmra.mxu0 %v1036
    %v1112 = vpop.f32.mrf.mxu0
    %v1113 = vadd.f32 0.0, %v1112
    %v1114 = vpop.f32.mrf.mxu0
    %v1115 = vadd.f32 0.0, %v1114
    %v1116 = vpop.f32.mrf.mxu0
    %v1117 = vpop.f32.mrf.mxu0
    %1118 = vdwg.mxu0
    %v1119 = vadd.f32 %v1032, %v1072
    %v1120 = vadd.f32 %v1033, %v1074
    %v1121 = vadd.f32 %v1034, %v1113
    %v1122 = vadd.f32 %v1035, %v1115
    %v1123 = vxor.u32 %v1119, 2147483648
    %v1124 = vmul.f32 %v1123, 1.442695
    %v1125 = vpow.pop %v1124
    %v1126 = vadd.f32 %v1125, 1.0
    %v1127 = vrcp.pop %v1126
    %v1128 = vmul.f32 1.0, %v1127
    %v1129 = vxor.u32 %v1120, 2147483648
    %v1130 = vmul.f32 %v1129, 1.442695
    %v1131 = vpow.pop %v1130
    %v1132 = vadd.f32 %v1131, 1.0
    %v1133 = vrcp.pop %v1132
    %v1134 = vmul.f32 1.0, %v1133
    %v1135 = vtanh.pop %v1121
    %v1136 = vxor.u32 %v1122, 2147483648
    %v1137 = vmul.f32 %v1136, 1.442695
    %v1138 = vpow.pop %v1137
    %v1139 = vadd.f32 %v1138, 1.0
    %v1140 = vrcp.pop %v1139
    %v1141 = vmul.f32 1.0, %v1140
    %v1142 = vmul.f32 %v1134, %v1028
    %v1143 = vmul.f32 %v1128, %v1135
    %v1144 = vadd.f32 %v1142, %v1143
    %v1145 = vtanh.pop %v1144
    %v1146 = vmul.f32 %v1141, %v1145
    %s1147 = scalar_lea.vmem [#allocation2], 128
    %v1148 = vld [vmem:[%s1147] sm:$0xff]
    %v1149 = vld [vmem:[%s1147 + $0x8] sm:$0xff]
    %v1150 = vld [vmem:[%s1147 + $0x10] sm:$0xff]
    %v1151 = vld [vmem:[%s1147 + $0x18] sm:$0xff]
    %v1152 = vpack.c.bf16 %v1146, %v1146
    %1153 = vmatprep.subr.bf16.mxu0 %v654
    %1154 = vmatpush1.bf16.msra.mxu0 %v653
    %1155 = vmatprep.subr.bf16.mxu0 %v650
    %1156 = vmatpush1.bf16.msra.mxu0 %v649
    %1157 = vmatprep.subr.bf16.mxu0 %v646
    %1158 = vmatpush1.bf16.msra.mxu0 %v645
    %1159 = vmatprep.subr.bf16.mxu0 %v642
    %1160 = vmatpush1.bf16.msra.mxu0 %v641
    %1161 = vmatprep.subr.bf16.mxu0 %v638
    %1162 = vmatpush1.bf16.msra.mxu0 %v637
    %1163 = vmatprep.subr.bf16.mxu0 %v634
    %1164 = vmatpush1.bf16.msra.mxu0 %v633
    %1165 = vmatprep.subr.bf16.mxu0 %v630
    %1166 = vmatpush1.bf16.msra.mxu0 %v629
    %1167 = vmatprep.subr.bf16.mxu0 %v626
    %1168 = vmatpush1.bf16.msra.mxu0 %v625
    %1169 = vmatprep.subr.bf16.mxu0 0
    %1170 = vmatpush2.bf16.msra.mxu0 0
    %1171 = vmatprep.subr.bf16.mxu0 0
    %1172 = vmatpush2.bf16.msra.mxu0 0
    %1173 = vmatprep.subr.bf16.mxu0 0
    %1174 = vmatpush2.bf16.msra.mxu0 0
    %1175 = vmatprep.subr.bf16.mxu0 0
    %1176 = vmatpush2.bf16.msra.mxu0 0
    %1177 = vmatprep.subr.bf16.mxu0 0
    %1178 = vmatpush2.bf16.msra.mxu0 0
    %1179 = vmatprep.subr.bf16.mxu0 0
    %1180 = vmatpush2.bf16.msra.mxu0 0
    %1181 = vmatprep.subr.bf16.mxu0 0
    %1182 = vmatpush2.bf16.msra.mxu0 0
    %1183 = vmatprep.subr.bf16.mxu0 0
    %1184 = vmatpush2.bf16.msra.mxu0 0
    %1185 = vmatprep.mubr.bf16.mxu0 0
    %1186 = vmatmul.mubr.bf16.gmra.mxu0 %v1152
    %v1187 = vpop.f32.mrf.mxu0
    %v1188 = vadd.f32 0.0, %v1187
    %v1189 = vpop.f32.mrf.mxu0
    %v1190 = vadd.f32 0.0, %v1189
    %v1191 = vpop.f32.mrf.mxu0
    %v1192 = vpop.f32.mrf.mxu0
    %1193 = vdwg.mxu0
    %1194 = vmatprep.subr.bf16.mxu0 %v656
    %1195 = vmatpush1.bf16.msra.mxu0 %v655
    %1196 = vmatprep.subr.bf16.mxu0 %v652
    %1197 = vmatpush1.bf16.msra.mxu0 %v651
    %1198 = vmatprep.subr.bf16.mxu0 %v648
    %1199 = vmatpush1.bf16.msra.mxu0 %v647
    %1200 = vmatprep.subr.bf16.mxu0 %v644
    %1201 = vmatpush1.bf16.msra.mxu0 %v643
    %1202 = vmatprep.subr.bf16.mxu0 %v640
    %1203 = vmatpush1.bf16.msra.mxu0 %v639
    %1204 = vmatprep.subr.bf16.mxu0 %v636
    %1205 = vmatpush1.bf16.msra.mxu0 %v635
    %1206 = vmatprep.subr.bf16.mxu0 %v632
    %1207 = vmatpush1.bf16.msra.mxu0 %v631
    %1208 = vmatprep.subr.bf16.mxu0 %v628
    %1209 = vmatpush1.bf16.msra.mxu0 %v627
    %1210 = vmatprep.subr.bf16.mxu0 0
    %1211 = vmatpush2.bf16.msra.mxu0 0
    %1212 = vmatprep.subr.bf16.mxu0 0
    %1213 = vmatpush2.bf16.msra.mxu0 0
    %1214 = vmatprep.subr.bf16.mxu0 0
    %1215 = vmatpush2.bf16.msra.mxu0 0
    %1216 = vmatprep.subr.bf16.mxu0 0
    %1217 = vmatpush2.bf16.msra.mxu0 0
    %1218 = vmatprep.subr.bf16.mxu0 0
    %1219 = vmatpush2.bf16.msra.mxu0 0
    %1220 = vmatprep.subr.bf16.mxu0 0
    %1221 = vmatpush2.bf16.msra.mxu0 0
    %1222 = vmatprep.subr.bf16.mxu0 0
    %1223 = vmatpush2.bf16.msra.mxu0 0
    %1224 = vmatprep.subr.bf16.mxu0 0
    %1225 = vmatpush2.bf16.msra.mxu0 0
    %1226 = vmatprep.mubr.bf16.mxu0 0
    %1227 = vmatmul.mubr.bf16.gmra.mxu0 %v1152
    %v1228 = vpop.f32.mrf.mxu0
    %v1229 = vadd.f32 0.0, %v1228
    %v1230 = vpop.f32.mrf.mxu0
    %v1231 = vadd.f32 0.0, %v1230
    %v1232 = vpop.f32.mrf.mxu0
    %v1233 = vpop.f32.mrf.mxu0
    %1234 = vdwg.mxu0
    %v1235 = vadd.f32 %v1148, %v1188
    %v1236 = vadd.f32 %v1149, %v1190
    %v1237 = vadd.f32 %v1150, %v1229
    %v1238 = vadd.f32 %v1151, %v1231
    %v1239 = vxor.u32 %v1235, 2147483648
    %v1240 = vmul.f32 %v1239, 1.442695
    %v1241 = vpow.pop %v1240
    %v1242 = vadd.f32 %v1241, 1.0
    %v1243 = vrcp.pop %v1242
    %v1244 = vmul.f32 1.0, %v1243
    %v1245 = vxor.u32 %v1236, 2147483648
    %v1246 = vmul.f32 %v1245, 1.442695
    %v1247 = vpow.pop %v1246
    %v1248 = vadd.f32 %v1247, 1.0
    %v1249 = vrcp.pop %v1248
    %v1250 = vmul.f32 1.0, %v1249
    %v1251 = vtanh.pop %v1237
    %v1252 = vxor.u32 %v1238, 2147483648
    %v1253 = vmul.f32 %v1252, 1.442695
    %v1254 = vpow.pop %v1253
    %v1255 = vadd.f32 %v1254, 1.0
    %v1256 = vrcp.pop %v1255
    %v1257 = vmul.f32 1.0, %v1256
    %v1258 = vmul.f32 %v1250, %v1144
    %v1259 = vmul.f32 %v1244, %v1251
    %v1260 = vadd.f32 %v1258, %v1259
    %v1261 = vtanh.pop %v1260
    %v1262 = vmul.f32 %v1257, %v1261
    %s1263 = scalar_lea.vmem [#allocation2], 160
    %v1264 = vld [vmem:[%s1263] sm:$0xff]
    %v1265 = vld [vmem:[%s1263 + $0x8] sm:$0xff]
    %v1266 = vld [vmem:[%s1263 + $0x10] sm:$0xff]
    %v1267 = vld [vmem:[%s1263 + $0x18] sm:$0xff]
    %v1268 = vpack.c.bf16 %v1262, %v1262
    %1269 = vmatprep.subr.bf16.mxu0 %v654
    %1270 = vmatpush1.bf16.msra.mxu0 %v653
    %1271 = vmatprep.subr.bf16.mxu0 %v650
    %1272 = vmatpush1.bf16.msra.mxu0 %v649
    %1273 = vmatprep.subr.bf16.mxu0 %v646
    %1274 = vmatpush1.bf16.msra.mxu0 %v645
    %1275 = vmatprep.subr.bf16.mxu0 %v642
    %1276 = vmatpush1.bf16.msra.mxu0 %v641
    %1277 = vmatprep.subr.bf16.mxu0 %v638
    %1278 = vmatpush1.bf16.msra.mxu0 %v637
    %1279 = vmatprep.subr.bf16.mxu0 %v634
    %1280 = vmatpush1.bf16.msra.mxu0 %v633
    %1281 = vmatprep.subr.bf16.mxu0 %v630
    %1282 = vmatpush1.bf16.msra.mxu0 %v629
    %1283 = vmatprep.subr.bf16.mxu0 %v626
    %1284 = vmatpush1.bf16.msra.mxu0 %v625
    %1285 = vmatprep.subr.bf16.mxu0 0
    %1286 = vmatpush2.bf16.msra.mxu0 0
    %1287 = vmatprep.subr.bf16.mxu0 0
    %1288 = vmatpush2.bf16.msra.mxu0 0
    %1289 = vmatprep.subr.bf16.mxu0 0
    %1290 = vmatpush2.bf16.msra.mxu0 0
    %1291 = vmatprep.subr.bf16.mxu0 0
    %1292 = vmatpush2.bf16.msra.mxu0 0
    %1293 = vmatprep.subr.bf16.mxu0 0
    %1294 = vmatpush2.bf16.msra.mxu0 0
    %1295 = vmatprep.subr.bf16.mxu0 0
    %1296 = vmatpush2.bf16.msra.mxu0 0
    %1297 = vmatprep.subr.bf16.mxu0 0
    %1298 = vmatpush2.bf16.msra.mxu0 0
    %1299 = vmatprep.subr.bf16.mxu0 0
    %1300 = vmatpush2.bf16.msra.mxu0 0
    %1301 = vmatprep.mubr.bf16.mxu0 0
    %1302 = vmatmul.mubr.bf16.gmra.mxu0 %v1268
    %v1303 = vpop.f32.mrf.mxu0
    %v1304 = vadd.f32 0.0, %v1303
    %v1305 = vpop.f32.mrf.mxu0
    %v1306 = vadd.f32 0.0, %v1305
    %v1307 = vpop.f32.mrf.mxu0
    %v1308 = vpop.f32.mrf.mxu0
    %1309 = vdwg.mxu0
    %1310 = vmatprep.subr.bf16.mxu0 %v656
    %1311 = vmatpush1.bf16.msra.mxu0 %v655
    %1312 = vmatprep.subr.bf16.mxu0 %v652
    %1313 = vmatpush1.bf16.msra.mxu0 %v651
    %1314 = vmatprep.subr.bf16.mxu0 %v648
    %1315 = vmatpush1.bf16.msra.mxu0 %v647
    %1316 = vmatprep.subr.bf16.mxu0 %v644
    %1317 = vmatpush1.bf16.msra.mxu0 %v643
    %1318 = vmatprep.subr.bf16.mxu0 %v640
    %1319 = vmatpush1.bf16.msra.mxu0 %v639
    %1320 = vmatprep.subr.bf16.mxu0 %v636
    %1321 = vmatpush1.bf16.msra.mxu0 %v635
    %1322 = vmatprep.subr.bf16.mxu0 %v632
    %1323 = vmatpush1.bf16.msra.mxu0 %v631
    %1324 = vmatprep.subr.bf16.mxu0 %v628
    %1325 = vmatpush1.bf16.msra.mxu0 %v627
    %1326 = vmatprep.subr.bf16.mxu0 0
    %1327 = vmatpush2.bf16.msra.mxu0 0
    %1328 = vmatprep.subr.bf16.mxu0 0
    %1329 = vmatpush2.bf16.msra.mxu0 0
    %1330 = vmatprep.subr.bf16.mxu0 0
    %1331 = vmatpush2.bf16.msra.mxu0 0
    %1332 = vmatprep.subr.bf16.mxu0 0
    %1333 = vmatpush2.bf16.msra.mxu0 0
    %1334 = vmatprep.subr.bf16.mxu0 0
    %1335 = vmatpush2.bf16.msra.mxu0 0
    %1336 = vmatprep.subr.bf16.mxu0 0
    %1337 = vmatpush2.bf16.msra.mxu0 0
    %1338 = vmatprep.subr.bf16.mxu0 0
    %1339 = vmatpush2.bf16.msra.mxu0 0
    %1340 = vmatprep.subr.bf16.mxu0 0
    %1341 = vmatpush2.bf16.msra.mxu0 0
    %1342 = vmatprep.mubr.bf16.mxu0 0
    %1343 = vmatmul.mubr.bf16.gmra.mxu0 %v1268
    %v1344 = vpop.f32.mrf.mxu0
    %v1345 = vadd.f32 0.0, %v1344
    %v1346 = vpop.f32.mrf.mxu0
    %v1347 = vadd.f32 0.0, %v1346
    %v1348 = vpop.f32.mrf.mxu0
    %v1349 = vpop.f32.mrf.mxu0
    %1350 = vdwg.mxu0
    %v1351 = vadd.f32 %v1264, %v1304
    %v1352 = vadd.f32 %v1265, %v1306
    %v1353 = vadd.f32 %v1266, %v1345
    %v1354 = vadd.f32 %v1267, %v1347
    %v1355 = vxor.u32 %v1351, 2147483648
    %v1356 = vmul.f32 %v1355, 1.442695
    %v1357 = vpow.pop %v1356
    %v1358 = vadd.f32 %v1357, 1.0
    %v1359 = vrcp.pop %v1358
    %v1360 = vmul.f32 1.0, %v1359
    %v1361 = vxor.u32 %v1352, 2147483648
    %v1362 = vmul.f32 %v1361, 1.442695
    %v1363 = vpow.pop %v1362
    %v1364 = vadd.f32 %v1363, 1.0
    %v1365 = vrcp.pop %v1364
    %v1366 = vmul.f32 1.0, %v1365
    %v1367 = vtanh.pop %v1353
    %v1368 = vxor.u32 %v1354, 2147483648
    %v1369 = vmul.f32 %v1368, 1.442695
    %v1370 = vpow.pop %v1369
    %v1371 = vadd.f32 %v1370, 1.0
    %v1372 = vrcp.pop %v1371
    %v1373 = vmul.f32 1.0, %v1372
    %v1374 = vmul.f32 %v1366, %v1260
    %v1375 = vmul.f32 %v1360, %v1367
    %v1376 = vadd.f32 %v1374, %v1375
    %v1377 = vtanh.pop %v1376
    %v1378 = vmul.f32 %v1373, %v1377
    %s1379 = scalar_lea.vmem [#allocation2], 192
    %v1380 = vld [vmem:[%s1379] sm:$0xff]
    %v1381 = vld [vmem:[%s1379 + $0x8] sm:$0xff]
    %v1382 = vld [vmem:[%s1379 + $0x10] sm:$0xff]
    %v1383 = vld [vmem:[%s1379 + $0x18] sm:$0xff]
    %v1384 = vpack.c.bf16 %v1378, %v1378
    %1385 = vmatprep.subr.bf16.mxu0 %v654
    %1386 = vmatpush1.bf16.msra.mxu0 %v653
    %1387 = vmatprep.subr.bf16.mxu0 %v650
    %1388 = vmatpush1.bf16.msra.mxu0 %v649
    %1389 = vmatprep.subr.bf16.mxu0 %v646
    %1390 = vmatpush1.bf16.msra.mxu0 %v645
    %1391 = vmatprep.subr.bf16.mxu0 %v642
    %1392 = vmatpush1.bf16.msra.mxu0 %v641
    %1393 = vmatprep.subr.bf16.mxu0 %v638
    %1394 = vmatpush1.bf16.msra.mxu0 %v637
    %1395 = vmatprep.subr.bf16.mxu0 %v634
    %1396 = vmatpush1.bf16.msra.mxu0 %v633
    %1397 = vmatprep.subr.bf16.mxu0 %v630
    %1398 = vmatpush1.bf16.msra.mxu0 %v629
    %1399 = vmatprep.subr.bf16.mxu0 %v626
    %1400 = vmatpush1.bf16.msra.mxu0 %v625
    %1401 = vmatprep.subr.bf16.mxu0 0
    %1402 = vmatpush2.bf16.msra.mxu0 0
    %1403 = vmatprep.subr.bf16.mxu0 0
    %1404 = vmatpush2.bf16.msra.mxu0 0
    %1405 = vmatprep.subr.bf16.mxu0 0
    %1406 = vmatpush2.bf16.msra.mxu0 0
    %1407 = vmatprep.subr.bf16.mxu0 0
    %1408 = vmatpush2.bf16.msra.mxu0 0
    %1409 = vmatprep.subr.bf16.mxu0 0
    %1410 = vmatpush2.bf16.msra.mxu0 0
    %1411 = vmatprep.subr.bf16.mxu0 0
    %1412 = vmatpush2.bf16.msra.mxu0 0
    %1413 = vmatprep.subr.bf16.mxu0 0
    %1414 = vmatpush2.bf16.msra.mxu0 0
    %1415 = vmatprep.subr.bf16.mxu0 0
    %1416 = vmatpush2.bf16.msra.mxu0 0
    %1417 = vmatprep.mubr.bf16.mxu0 0
    %1418 = vmatmul.mubr.bf16.gmra.mxu0 %v1384
    %v1419 = vpop.f32.mrf.mxu0
    %v1420 = vadd.f32 0.0, %v1419
    %v1421 = vpop.f32.mrf.mxu0
    %v1422 = vadd.f32 0.0, %v1421
    %v1423 = vpop.f32.mrf.mxu0
    %v1424 = vpop.f32.mrf.mxu0
    %1425 = vdwg.mxu0
    %1426 = vmatprep.subr.bf16.mxu0 %v656
    %1427 = vmatpush1.bf16.msra.mxu0 %v655
    %1428 = vmatprep.subr.bf16.mxu0 %v652
    %1429 = vmatpush1.bf16.msra.mxu0 %v651
    %1430 = vmatprep.subr.bf16.mxu0 %v648
    %1431 = vmatpush1.bf16.msra.mxu0 %v647
    %1432 = vmatprep.subr.bf16.mxu0 %v644
    %1433 = vmatpush1.bf16.msra.mxu0 %v643
    %1434 = vmatprep.subr.bf16.mxu0 %v640
    %1435 = vmatpush1.bf16.msra.mxu0 %v639
    %1436 = vmatprep.subr.bf16.mxu0 %v636
    %1437 = vmatpush1.bf16.msra.mxu0 %v635
    %1438 = vmatprep.subr.bf16.mxu0 %v632
    %1439 = vmatpush1.bf16.msra.mxu0 %v631
    %1440 = vmatprep.subr.bf16.mxu0 %v628
    %1441 = vmatpush1.bf16.msra.mxu0 %v627
    %1442 = vmatprep.subr.bf16.mxu0 0
    %1443 = vmatpush2.bf16.msra.mxu0 0
    %1444 = vmatprep.subr.bf16.mxu0 0
    %1445 = vmatpush2.bf16.msra.mxu0 0
    %1446 = vmatprep.subr.bf16.mxu0 0
    %1447 = vmatpush2.bf16.msra.mxu0 0
    %1448 = vmatprep.subr.bf16.mxu0 0
    %1449 = vmatpush2.bf16.msra.mxu0 0
    %1450 = vmatprep.subr.bf16.mxu0 0
    %1451 = vmatpush2.bf16.msra.mxu0 0
    %1452 = vmatprep.subr.bf16.mxu0 0
    %1453 = vmatpush2.bf16.msra.mxu0 0
    %1454 = vmatprep.subr.bf16.mxu0 0
    %1455 = vmatpush2.bf16.msra.mxu0 0
    %1456 = vmatprep.subr.bf16.mxu0 0
    %1457 = vmatpush2.bf16.msra.mxu0 0
    %1458 = vmatprep.mubr.bf16.mxu0 0
    %1459 = vmatmul.mubr.bf16.gmra.mxu0 %v1384
    %v1460 = vpop.f32.mrf.mxu0
    %v1461 = vadd.f32 0.0, %v1460
    %v1462 = vpop.f32.mrf.mxu0
    %v1463 = vadd.f32 0.0, %v1462
    %v1464 = vpop.f32.mrf.mxu0
    %v1465 = vpop.f32.mrf.mxu0
    %1466 = vdwg.mxu0
    %v1467 = vadd.f32 %v1380, %v1420
    %v1468 = vadd.f32 %v1381, %v1422
    %v1469 = vadd.f32 %v1382, %v1461
    %v1470 = vadd.f32 %v1383, %v1463
    %v1471 = vxor.u32 %v1467, 2147483648
    %v1472 = vmul.f32 %v1471, 1.442695
    %v1473 = vpow.pop %v1472
    %v1474 = vadd.f32 %v1473, 1.0
    %v1475 = vrcp.pop %v1474
    %v1476 = vmul.f32 1.0, %v1475
    %v1477 = vxor.u32 %v1468, 2147483648
    %v1478 = vmul.f32 %v1477, 1.442695
    %v1479 = vpow.pop %v1478
    %v1480 = vadd.f32 %v1479, 1.0
    %v1481 = vrcp.pop %v1480
    %v1482 = vmul.f32 1.0, %v1481
    %v1483 = vtanh.pop %v1469
    %v1484 = vxor.u32 %v1470, 2147483648
    %v1485 = vmul.f32 %v1484, 1.442695
    %v1486 = vpow.pop %v1485
    %v1487 = vadd.f32 %v1486, 1.0
    %v1488 = vrcp.pop %v1487
    %v1489 = vmul.f32 1.0, %v1488
    %v1490 = vmul.f32 %v1482, %v1376
    %v1491 = vmul.f32 %v1476, %v1483
    %v1492 = vadd.f32 %v1490, %v1491
    %v1493 = vtanh.pop %v1492
    %v1494 = vmul.f32 %v1489, %v1493
    %s1495 = scalar_lea.vmem [#allocation2], 224
    %v1496 = vld [vmem:[%s1495] sm:$0xff]
    %v1497 = vld [vmem:[%s1495 + $0x8] sm:$0xff]
    %v1498 = vld [vmem:[%s1495 + $0x10] sm:$0xff]
    %v1499 = vld [vmem:[%s1495 + $0x18] sm:$0xff]
    %v1500 = vpack.c.bf16 %v1494, %v1494
    %1501 = vmatprep.subr.bf16.mxu0 %v654
    %1502 = vmatpush1.bf16.msra.mxu0 %v653
    %1503 = vmatprep.subr.bf16.mxu0 %v650
    %1504 = vmatpush1.bf16.msra.mxu0 %v649
    %1505 = vmatprep.subr.bf16.mxu0 %v646
    %1506 = vmatpush1.bf16.msra.mxu0 %v645
    %1507 = vmatprep.subr.bf16.mxu0 %v642
    %1508 = vmatpush1.bf16.msra.mxu0 %v641
    %1509 = vmatprep.subr.bf16.mxu0 %v638
    %1510 = vmatpush1.bf16.msra.mxu0 %v637
    %1511 = vmatprep.subr.bf16.mxu0 %v634
    %1512 = vmatpush1.bf16.msra.mxu0 %v633
    %1513 = vmatprep.subr.bf16.mxu0 %v630
    %1514 = vmatpush1.bf16.msra.mxu0 %v629
    %1515 = vmatprep.subr.bf16.mxu0 %v626
    %1516 = vmatpush1.bf16.msra.mxu0 %v625
    %1517 = vmatprep.subr.bf16.mxu0 0
    %1518 = vmatpush2.bf16.msra.mxu0 0
    %1519 = vmatprep.subr.bf16.mxu0 0
    %1520 = vmatpush2.bf16.msra.mxu0 0
    %1521 = vmatprep.subr.bf16.mxu0 0
    %1522 = vmatpush2.bf16.msra.mxu0 0
    %1523 = vmatprep.subr.bf16.mxu0 0
    %1524 = vmatpush2.bf16.msra.mxu0 0
    %1525 = vmatprep.subr.bf16.mxu0 0
    %1526 = vmatpush2.bf16.msra.mxu0 0
    %1527 = vmatprep.subr.bf16.mxu0 0
    %1528 = vmatpush2.bf16.msra.mxu0 0
    %1529 = vmatprep.subr.bf16.mxu0 0
    %1530 = vmatpush2.bf16.msra.mxu0 0
    %1531 = vmatprep.subr.bf16.mxu0 0
    %1532 = vmatpush2.bf16.msra.mxu0 0
    %1533 = vmatprep.mubr.bf16.mxu0 0
    %1534 = vmatmul.mubr.bf16.gmra.mxu0 %v1500
    %v1535 = vpop.f32.mrf.mxu0
    %v1536 = vadd.f32 0.0, %v1535
    %v1537 = vpop.f32.mrf.mxu0
    %v1538 = vadd.f32 0.0, %v1537
    %v1539 = vpop.f32.mrf.mxu0
    %v1540 = vpop.f32.mrf.mxu0
    %1541 = vdwg.mxu0
    %1542 = vmatprep.subr.bf16.mxu0 %v656
    %1543 = vmatpush1.bf16.msra.mxu0 %v655
    %1544 = vmatprep.subr.bf16.mxu0 %v652
    %1545 = vmatpush1.bf16.msra.mxu0 %v651
    %1546 = vmatprep.subr.bf16.mxu0 %v648
    %1547 = vmatpush1.bf16.msra.mxu0 %v647
    %1548 = vmatprep.subr.bf16.mxu0 %v644
    %1549 = vmatpush1.bf16.msra.mxu0 %v643
    %1550 = vmatprep.subr.bf16.mxu0 %v640
    %1551 = vmatpush1.bf16.msra.mxu0 %v639
    %1552 = vmatprep.subr.bf16.mxu0 %v636
    %1553 = vmatpush1.bf16.msra.mxu0 %v635
    %1554 = vmatprep.subr.bf16.mxu0 %v632
    %1555 = vmatpush1.bf16.msra.mxu0 %v631
    %1556 = vmatprep.subr.bf16.mxu0 %v628
    %1557 = vmatpush1.bf16.msra.mxu0 %v627
    %1558 = vmatprep.subr.bf16.mxu0 0
    %1559 = vmatpush2.bf16.msra.mxu0 0
    %1560 = vmatprep.subr.bf16.mxu0 0
    %1561 = vmatpush2.bf16.msra.mxu0 0
    %1562 = vmatprep.subr.bf16.mxu0 0
    %1563 = vmatpush2.bf16.msra.mxu0 0
    %1564 = vmatprep.subr.bf16.mxu0 0
    %1565 = vmatpush2.bf16.msra.mxu0 0
    %1566 = vmatprep.subr.bf16.mxu0 0
    %1567 = vmatpush2.bf16.msra.mxu0 0
    %1568 = vmatprep.subr.bf16.mxu0 0
    %1569 = vmatpush2.bf16.msra.mxu0 0
    %1570 = vmatprep.subr.bf16.mxu0 0
    %1571 = vmatpush2.bf16.msra.mxu0 0
    %1572 = vmatprep.subr.bf16.mxu0 0
    %1573 = vmatpush2.bf16.msra.mxu0 0
    %1574 = vmatprep.mubr.bf16.mxu0 0
    %1575 = vmatmul.mubr.bf16.gmra.mxu0 %v1500
    %v1576 = vpop.f32.mrf.mxu0
    %v1577 = vadd.f32 0.0, %v1576
    %v1578 = vpop.f32.mrf.mxu0
    %v1579 = vadd.f32 0.0, %v1578
    %v1580 = vpop.f32.mrf.mxu0
    %v1581 = vpop.f32.mrf.mxu0
    %1582 = vdwg.mxu0
    %v1583 = vadd.f32 %v1496, %v1536
    %v1584 = vadd.f32 %v1497, %v1538
    %v1585 = vadd.f32 %v1498, %v1577
    %v1586 = vadd.f32 %v1499, %v1579
    %v1587 = vxor.u32 %v1583, 2147483648
    %v1588 = vmul.f32 %v1587, 1.442695
    %v1589 = vpow.pop %v1588
    %v1590 = vadd.f32 %v1589, 1.0
    %v1591 = vrcp.pop %v1590
    %v1592 = vmul.f32 1.0, %v1591
    %v1593 = vxor.u32 %v1584, 2147483648
    %v1594 = vmul.f32 %v1593, 1.442695
    %v1595 = vpow.pop %v1594
    %v1596 = vadd.f32 %v1595, 1.0
    %v1597 = vrcp.pop %v1596
    %v1598 = vmul.f32 1.0, %v1597
    %v1599 = vtanh.pop %v1585
    %v1600 = vxor.u32 %v1586, 2147483648
    %v1601 = vmul.f32 %v1600, 1.442695
    %v1602 = vpow.pop %v1601
    %v1603 = vadd.f32 %v1602, 1.0
    %v1604 = vrcp.pop %v1603
    %v1605 = vmul.f32 1.0, %v1604
    %v1606 = vmul.f32 %v1598, %v1492
    %v1607 = vmul.f32 %v1592, %v1599
    %v1608 = vadd.f32 %v1606, %v1607
    %v1609 = vtanh.pop %v1608
    %v1610 = vmul.f32 %v1605, %v1609
    %1611 = vst [vmem:[#allocation3] sm:$0xff] %v1610
    %1612 = vst [vmem:[#allocation4] sm:$0xff] %v1608
    // Predicated region
    $region34: #{tpu_custom_call.1} parent=1 // pred_check
      %p1613 = pneg %p60
    $region35: #{tpu_custom_call.1} parent=1 // pred_check_branch
      %1615 = sbr.rel (%p1613) target = $region37
    $region36: #{tpu_custom_call.1} parent=1 // pred_region
      %1616 = vst [vmem:[#allocation11] sm:$0xff] %v1610
    $region37: #{tpu_custom_call.1} parent=1 // pred_fallthru
      _
    // Predicated region
    $region38: #{tpu_custom_call.1} parent=1 // pred_check
      _
    $region39: #{tpu_custom_call.1} parent=1 // pred_check_branch
      %1618 = sbr.rel (0) target = $region41
    $region40: #{tpu_custom_call.1} parent=1 // pred_region
      %s1620 = ssub.s32 128, 128
      %1621 = vsyncadd [#allocation7], %s1620
      %s1623 = sshll.u32 [#allocation11], 4
      %s1624 = int_to_ptr.vmem [resolvable:$true] %s1623
      %1626 = dma.vmem_to_hbm [thread:$0]  %s1624, 128, %s4, [#allocation7]
    $region41: #{tpu_custom_call.1} parent=1 // pred_fallthru
      _
    // Predicated region
    $region42: #{tpu_custom_call.1} parent=1 // pred_check
      _
    $region43: #{tpu_custom_call.1} parent=1 // pred_check_branch
      %1628 = sbr.rel (0) target = $region45
    $region44: #{tpu_custom_call.1} parent=1 // pred_region
      %1629 = dma.done [#allocation7], 128
    $region45: #{tpu_custom_call.1} parent=1 // pred_fallthru
      _
    %1630 = vsyncpa [#allocation6], 1
    %1631 = vsyncpa [#allocation9], 1
    %1632 = vsyncpa [#allocation7], 1

</llo_original>
